<compile_context>
chip_gen: v7x
topology: tpu7x:2x2x1
jax: 0.10.0
libtpu: 0.0.40
codegen_flags: <defaults>
</compile_context>

<pallas_src>
import functools

import jax
import jax.numpy as jnp
from jax.experimental import pallas as pl
from jax.experimental.pallas import tpu as pltpu


# ----------------------------- kernel helpers ------------------------------ #

def _layernorm(x, gamma, beta, eps):
    """LayerNorm over the last dim, stats in f32. gamma/beta: (1, H)."""
    mean = jnp.mean(x, axis=-1, keepdims=True)
    cen = x - mean
    var = jnp.mean(cen * cen, axis=-1, keepdims=True)
    inv = jax.lax.rsqrt(var + eps)
    return (cen * inv) * gamma + beta


def _gelu(x):
    # BERT GELU (tanh approximation) — tanh goes to the EUP.
    # TODO(synk): HF BERT default is the exact erf GELU; tanh approx differs
    # slightly from the PyTorch reference (well within normal tolerance).
    c = jnp.float32(0.7978845608028654)  # sqrt(2/pi)
    return 0.5 * x * (1.0 + jnp.tanh(c * (x + 0.044715 * x * x * x)))


# ------------------------------ fused kernel ------------------------------- #

def _bert_kernel(emb_ref, mask_ref, cls_sel_ref, embg_ref, embb_ref,
                 wqkv_ref, bqkv_ref, wo_ref, bo_ref, ln1g_ref, ln1b_ref,
                 wi_ref, bi_ref, wf_ref, bf_ref, ln2g_ref, ln2b_ref,
                 outw_ref, outb_ref,
                 o_ref,
                 h_ref,
                 *, B, S, heads, head_dim, eps, scale):
    """One grid step == one transformer layer.

    emb_ref     : (M, H)  f32   summed embeddings (M = B*S)
    mask_ref    : (B,1,S) f32   additive attention mask (shared across heads)
    cls_sel_ref : (B, M)  bf16  one-hot row selector for CLS tokens
    per-layer weights arrive with the layer dim squeezed out by the BlockSpec
    o_ref       : (B, R)  f32   final output (written at the last layer)
    h_ref       : (M, H)  f32   VMEM-resident activation state
    """
    l = pl.program_id(0)
    H = heads * head_dim

    @pl.when(l == 0)
    def _():
        # Embedding LayerNorm (no residual) fused into the first grid step.
        h_ref[...] = _layernorm(emb_ref[...], embg_ref[...], embb_ref[...], eps)

    h = h_ref[...]                                    # (M, H) f32
    hb = h.astype(jnp.bfloat16)

    # ---- fused Q/K/V projection: one (H, 3H) matmul, bf16 in / f32 acc ----
    qkv = jnp.dot(hb, wqkv_ref[...],
                  preferred_element_type=jnp.float32) + bqkv_ref[...]
    q3 = qkv[:, 0 * H:1 * H].reshape(B, S, H)
    k3 = qkv[:, 1 * H:2 * H].reshape(B, S, H)
    v3 = qkv[:, 2 * H:3 * H].reshape(B, S, H)

    mask = mask_ref[...]                              # (B, 1, S), f32

    # ---- per-head masked softmax attention (static head loop, unrolled) ----
    ctx_heads = []
    for hd in range(heads):
        sl = slice(hd * head_dim, (hd + 1) * head_dim)
        qh = q3[:, :, sl].astype(jnp.bfloat16)
        kh = k3[:, :, sl].astype(jnp.bfloat16)
        vh = v3[:, :, sl].astype(jnp.bfloat16)
        s = jnp.einsum("bqd,bkd->bqk", qh, kh,
                       preferred_element_type=jnp.float32) * scale + mask
        s = s - jnp.max(s, axis=-1, keepdims=True)
        p = jnp.exp(s)
        p = p * pl.reciprocal(jnp.sum(p, axis=-1, keepdims=True), approx=True)
        ctx_heads.append(
            jnp.einsum("bqk,bkd->bqd", p.astype(jnp.bfloat16), vh,
                       preferred_element_type=jnp.float32))
    ctx = jnp.concatenate(ctx_heads, axis=-1).reshape(B * S, H)

    # ---- attention output projection + residual LayerNorm ----
    attn_out = jnp.dot(ctx.astype(jnp.bfloat16), wo_ref[...],
                       preferred_element_type=jnp.float32) + bo_ref[...]
    h = _layernorm(attn_out + h, ln1g_ref[...], ln1b_ref[...], eps)

    # ---- FFN (GELU) + residual LayerNorm ----
    inter = _gelu(jnp.dot(h.astype(jnp.bfloat16), wi_ref[...],
                          preferred_element_type=jnp.float32) + bi_ref[...])
    ffn = jnp.dot(inter.astype(jnp.bfloat16), wf_ref[...],
                  preferred_element_type=jnp.float32) + bf_ref[...]
    h = _layernorm(ffn + h, ln2g_ref[...], ln2b_ref[...], eps)

    h_ref[...] = h

    @pl.when(l == pl.num_programs(0) - 1)
    def _():
        # cls_vec = sequence_output[:, 0]  (one-hot row selection on the MXU),
        # Dropout(p=0.1) is identity at inference, then out_linear_layer.
        cls = jnp.dot(cls_sel_ref[...], h.astype(jnp.bfloat16),
                      preferred_element_type=jnp.float32)
        o_ref[...] = jnp.dot(cls.astype(jnp.bfloat16), outw_ref[...],
                             preferred_element_type=jnp.float32) + outb_ref[...]


# ------------------------------ model (glue) ------------------------------- #

class Config:
    vocab_size = 100
    hidden = 32          # input_size
    heads = 4
    head_dim = hidden // heads
    layers = 2
    intermediate = 64
    max_pos = 16
    type_vocab = 2
    result_size = 16
    ln_eps = 1e-12


def init_params(key, cfg):
    """Deterministic synthetic BERT + output-linear parameters.

    Per-layer weights are stacked along a leading layer axis; matmul weights
    are stored in bf16 (MXU inputs), biases / LN params stay f32.
    """
    H, I, R, L = cfg.hidden, cfg.intermediate, cfg.result_size, cfg.layers

    def nrm(k, shape, dtype=jnp.float32):
        return (0.02 * jax.random.normal(k, shape, dtype=jnp.float32)).astype(dtype)

    keys = iter(jax.random.split(key, 16))
    p = {
        "word_emb": nrm(next(keys), (cfg.vocab_size, H)),
        "pos_emb": nrm(next(keys), (cfg.max_pos, H)),
        "type_emb": nrm(next(keys), (cfg.type_vocab, H)),
        "emb_ln_g": jnp.ones((1, H), jnp.float32),
        "emb_ln_b": jnp.zeros((1, H), jnp.float32),
        # stacked transformer layers
        "wqkv": nrm(next(keys), (L, H, 3 * H), jnp.bfloat16),
        "bqkv": jnp.zeros((L, 1, 3 * H), jnp.float32),
        "wo": nrm(next(keys), (L, H, H), jnp.bfloat16),
        "bo": jnp.zeros((L, 1, H), jnp.float32),
        "ln1_g": jnp.ones((L, 1, H), jnp.float32),
        "ln1_b": jnp.zeros((L, 1, H), jnp.float32),
        "wi": nrm(next(keys), (L, H, I), jnp.bfloat16),
        "bi": jnp.zeros((L, 1, I), jnp.float32),
        "wf": nrm(next(keys), (L, I, H), jnp.bfloat16),
        "bf": jnp.zeros((L, 1, H), jnp.float32),
        "ln2_g": jnp.ones((L, 1, H), jnp.float32),
        "ln2_b": jnp.zeros((L, 1, H), jnp.float32),
        # out_linear_layer (nn.Linear(input_size, result_size)); weight stored
        # already transposed to (in, out) for the x @ W layout used here.
        "out_w": nrm(next(keys), (H, R), jnp.bfloat16),
        "out_b": jnp.zeros((1, R), jnp.float32),
    }
    return p


@functools.partial(jax.jit, static_argnums=(3,))
def basic_bert_unit_forward(params, batch_word_list, attention_mask, cfg):
    B, S = batch_word_list.shape
    M = B * S
    H, I, R, L = cfg.hidden, cfg.intermediate, cfg.result_size, cfg.layers

    # --- embedding lookup (glue; gather has no cheap dense-kernel form) ---
    tok = jnp.take(params["word_emb"], batch_word_list, axis=0)       # (B,S,H)
    pos = params["pos_emb"][:S][None, :, :]                           # (1,S,H)
    typ = params["type_emb"][0][None, None, :]                        # token_type_ids = 0
    emb = (tok + pos + typ).reshape(M, H).astype(jnp.float32)

    # Additive attention mask, ONE copy shared across all heads.
    add_mask = ((1.0 - attention_mask.astype(jnp.float32)) * -10000.0
                ).reshape(B, 1, S)

    # One-hot selector picking rows 0, S, 2S, ... (the CLS tokens) of (M, H).
    cls_sel = jax.nn.one_hot(jnp.arange(B) * S, M, dtype=jnp.bfloat16)  # (B, M)

    scale = 1.0 / float(cfg.head_dim) ** 0.5

    kern = functools.partial(_bert_kernel, B=B, S=S, heads=cfg.heads,
                             head_dim=cfg.head_dim, eps=cfg.ln_eps, scale=scale)

    full2 = lambda l: (0, 0)
    full3 = lambda l: (0, 0, 0)
    per_layer = lambda l: (l, 0, 0)     # stream per-layer weights, layer dim squeezed

    in_specs = [
        pl.BlockSpec((M, H), full2),                 # emb
        pl.BlockSpec((B, 1, S), full3),              # add_mask
        pl.BlockSpec((B, M), full2),                 # cls_sel
        pl.BlockSpec((1, H), full2),                 # emb_ln_g
        pl.BlockSpec((1, H), full2),                 # emb_ln_b
        pl.BlockSpec((None, H, 3 * H), per_layer),   # wqkv
        pl.BlockSpec((None, 1, 3 * H), per_layer),   # bqkv
        pl.BlockSpec((None, H, H), per_layer),       # wo
        pl.BlockSpec((None, 1, H), per_layer),       # bo
        pl.BlockSpec((None, 1, H), per_layer),       # ln1_g
        pl.BlockSpec((None, 1, H), per_layer),       # ln1_b
        pl.BlockSpec((None, H, I), per_layer),       # wi
        pl.BlockSpec((None, 1, I), per_layer),       # bi
        pl.BlockSpec((None, I, H), per_layer),       # wf
        pl.BlockSpec((None, 1, H), per_layer),       # bf
        pl.BlockSpec((None, 1, H), per_layer),       # ln2_g
        pl.BlockSpec((None, 1, H), per_layer),       # ln2_b
        pl.BlockSpec((H, R), full2),                 # out_w
        pl.BlockSpec((1, R), full2),                 # out_b
    ]

    out = pl.pallas_call(
        kern,
        out_shape=jax.ShapeDtypeStruct((B, R), jnp.float32),
        grid_spec=pltpu.PrefetchScalarGridSpec(
            num_scalar_prefetch=0,
            grid=(L,),                               # one grid step per layer
            in_specs=in_specs,
            out_specs=pl.BlockSpec((B, R), full2),
            scratch_shapes=[pltpu.VMEM((M, H), jnp.float32)],  # resident h state
        ),
        compiler_params=pltpu.CompilerParams(
            dimension_semantics=("arbitrary",)),     # layers are sequential
    )(emb, add_mask, cls_sel,
      params["emb_ln_g"], params["emb_ln_b"],
      params["wqkv"], params["bqkv"], params["wo"], params["bo"],
      params["ln1_g"], params["ln1_b"],
      params["wi"], params["bi"], params["wf"], params["bf"],
      params["ln2_g"], params["ln2_b"],
      params["out_w"], params["out_b"])
    return out


# ---------------------------------- main ----------------------------------- #

if __name__ == "__main__":
    cfg = Config()
    key = jax.random.PRNGKey(0)
    k_param, k_ids = jax.random.split(key)

    B, S = 2, 8
    params = init_params(k_param, cfg)
    batch_word_list = jax.random.randint(k_ids, (B, S), 0, cfg.vocab_size,
                                         dtype=jnp.int32)
    # mask out the last two tokens of the second sequence
    attention_mask = jnp.array(
        [[1, 1, 1, 1, 1, 1, 1, 1],
         [1, 1, 1, 1, 1, 1, 0, 0]], dtype=jnp.int32)

    out = basic_bert_unit_forward(params, batch_word_list, attention_mask, cfg)
    out = jax.block_until_ready(out)
    assert out.shape == (B, cfg.result_size)
    assert bool(jnp.all(jnp.isfinite(out)))
    print("KERNEL_OK")
</pallas_src>

<mosaic_0001>
module attributes {stable_mosaic.version = 11 : i64} {
  func.func @_bert_kernel(%arg0: i32, %arg1: memref<16x32xf32, #tpu.memory_space<vmem>>, %arg2: memref<2x1x8xf32, #tpu.memory_space<vmem>>, %arg3: memref<2x16xbf16, #tpu.memory_space<vmem>>, %arg4: memref<1x32xf32, #tpu.memory_space<vmem>>, %arg5: memref<1x32xf32, #tpu.memory_space<vmem>>, %arg6: memref<1x32x96xbf16, #tpu.memory_space<vmem>>, %arg7: memref<1x1x96xf32, #tpu.memory_space<vmem>>, %arg8: memref<1x32x32xbf16, #tpu.memory_space<vmem>>, %arg9: memref<1x1x32xf32, #tpu.memory_space<vmem>>, %arg10: memref<1x1x32xf32, #tpu.memory_space<vmem>>, %arg11: memref<1x1x32xf32, #tpu.memory_space<vmem>>, %arg12: memref<1x32x64xbf16, #tpu.memory_space<vmem>>, %arg13: memref<1x1x64xf32, #tpu.memory_space<vmem>>, %arg14: memref<1x64x32xbf16, #tpu.memory_space<vmem>>, %arg15: memref<1x1x32xf32, #tpu.memory_space<vmem>>, %arg16: memref<1x1x32xf32, #tpu.memory_space<vmem>>, %arg17: memref<1x1x32xf32, #tpu.memory_space<vmem>>, %arg18: memref<32x16xbf16, #tpu.memory_space<vmem>>, %arg19: memref<1x16xf32, #tpu.memory_space<vmem>>, %arg20: memref<2x16xf32, #tpu.memory_space<vmem>>, %arg21: memref<16x32xf32, #tpu.memory_space<vmem>>) attributes {dimension_semantics = [#tpu.dimension_semantics<arbitrary>], iteration_bounds = array<i64: 2>, scalar_prefetch = 0 : i64, scratch_operands = 1 : i64, tpu.core_type = #tpu.core_type<tc>, window_params = [{pipeline_mode = #tpu.pipeline_mode<synchronous>, transform_indices = @transform_0, window_bounds = array<i64: 16, 32>}, {pipeline_mode = #tpu.pipeline_mode<synchronous>, transform_indices = @transform_1, window_bounds = array<i64: 2, 1, 8>}, {pipeline_mode = #tpu.pipeline_mode<synchronous>, transform_indices = @transform_2, window_bounds = array<i64: 2, 16>}, {pipeline_mode = #tpu.pipeline_mode<synchronous>, transform_indices = @transform_3, window_bounds = array<i64: 1, 32>}, {pipeline_mode = #tpu.pipeline_mode<synchronous>, transform_indices = @transform_4, window_bounds = array<i64: 1, 32>}, {transform_indices = @transform_5, window_bounds = array<i64: 1, 32, 96>}, {transform_indices = @transform_6, window_bounds = array<i64: 1, 1, 96>}, {transform_indices = @transform_7, window_bounds = array<i64: 1, 32, 32>}, {transform_indices = @transform_8, window_bounds = array<i64: 1, 1, 32>}, {transform_indices = @transform_9, window_bounds = array<i64: 1, 1, 32>}, {transform_indices = @transform_10, window_bounds = array<i64: 1, 1, 32>}, {transform_indices = @transform_11, window_bounds = array<i64: 1, 32, 64>}, {transform_indices = @transform_12, window_bounds = array<i64: 1, 1, 64>}, {transform_indices = @transform_13, window_bounds = array<i64: 1, 64, 32>}, {transform_indices = @transform_14, window_bounds = array<i64: 1, 1, 32>}, {transform_indices = @transform_15, window_bounds = array<i64: 1, 1, 32>}, {transform_indices = @transform_16, window_bounds = array<i64: 1, 1, 32>}, {pipeline_mode = #tpu.pipeline_mode<synchronous>, transform_indices = @transform_17, window_bounds = array<i64: 32, 16>}, {pipeline_mode = #tpu.pipeline_mode<synchronous>, transform_indices = @transform_18, window_bounds = array<i64: 1, 16>}, {pipeline_mode = #tpu.pipeline_mode<synchronous>, transform_indices = @transform_19, window_bounds = array<i64: 2, 16>}]} {
    %c0_i32 = arith.constant 0 : i32
    %0 = arith.cmpi eq, %arg0, %c0_i32 : i32
    %1 = arith.extui %0 : i1 to i32
    %c0_i32_0 = arith.constant 0 : i32
    %2 = arith.cmpi ne, %1, %c0_i32_0 : i32
    scf.if %2 {
      %c0_81 = arith.constant 0 : index
      %c0_82 = arith.constant 0 : index
      %204 = vector.load %arg1[%c0_81, %c0_82] : memref<16x32xf32, #tpu.memory_space<vmem>>, vector<16x32xf32>
      %c0_83 = arith.constant 0 : index
      %c0_84 = arith.constant 0 : index
      %205 = vector.load %arg4[%c0_83, %c0_84] : memref<1x32xf32, #tpu.memory_space<vmem>>, vector<1x32xf32>
      %c0_85 = arith.constant 0 : index
      %c0_86 = arith.constant 0 : index
      %206 = vector.load %arg5[%c0_85, %c0_86] : memref<1x32xf32, #tpu.memory_space<vmem>>, vector<1x32xf32>
      %cst_87 = arith.constant dense<0.000000e+00> : vector<16xf32>
      %207 = vector.multi_reduction <add>, %204, %cst_87 [1] : vector<16x32xf32> to vector<16xf32>
      %208 = vector.shape_cast %207 : vector<16xf32> to vector<16x1xf32>
      %cst_88 = arith.constant 3.200000e+01 : f32
      %209 = vector.broadcast %cst_88 : f32 to vector<16x1xf32>
      %210 = arith.divf %208, %209 : vector<16x1xf32>
      %211 = vector.broadcast %210 : vector<16x1xf32> to vector<16x32xf32>
      %212 = arith.subf %204, %211 : vector<16x32xf32>
      %213 = arith.mulf %212, %212 : vector<16x32xf32>
      %cst_89 = arith.constant dense<0.000000e+00> : vector<16xf32>
      %214 = vector.multi_reduction <add>, %213, %cst_89 [1] : vector<16x32xf32> to vector<16xf32>
      %215 = vector.shape_cast %214 : vector<16xf32> to vector<16x1xf32>
      %cst_90 = arith.constant 3.200000e+01 : f32
      %216 = vector.broadcast %cst_90 : f32 to vector<16x1xf32>
      %217 = arith.divf %215, %216 : vector<16x1xf32>
      %cst_91 = arith.constant 9.99999996E-13 : f32
      %218 = vector.broadcast %cst_91 : f32 to vector<16x1xf32>
      %219 = arith.addf %217, %218 : vector<16x1xf32>
      %220 = math.rsqrt %219 : vector<16x1xf32>
      %221 = vector.broadcast %220 : vector<16x1xf32> to vector<16x32xf32>
      %222 = arith.mulf %212, %221 : vector<16x32xf32>
      %223 = vector.broadcast %205 : vector<1x32xf32> to vector<16x32xf32>
      %224 = arith.mulf %222, %223 : vector<16x32xf32>
      %225 = vector.broadcast %206 : vector<1x32xf32> to vector<16x32xf32>
      %226 = arith.addf %224, %225 : vector<16x32xf32>
      %c0_92 = arith.constant 0 : index
      %c0_93 = arith.constant 0 : index
      %227 = vector.load %arg21[%c0_92, %c0_93] : memref<16x32xf32, #tpu.memory_space<vmem>>, vector<16x32xf32>
      tpu.vector_store %arg21[%c0_92, %c0_93], %226 {strides = array<i32>} : memref<16x32xf32, #tpu.memory_space<vmem>>, vector<16x32xf32>,
    } else {
    }
    %c0 = arith.constant 0 : index
    %c0_1 = arith.constant 0 : index
    %3 = vector.load %arg21[%c0, %c0_1] : memref<16x32xf32, #tpu.memory_space<vmem>>, vector<16x32xf32>
    %4 = arith.truncf %3 : vector<16x32xf32> to vector<16x32xbf16>
    %c0_2 = arith.constant 0 : index
    %c0_3 = arith.constant 0 : index
    %c0_4 = arith.constant 0 : index
    %5 = vector.load %arg6[%c0_2, %c0_3, %c0_4] : memref<1x32x96xbf16, #tpu.memory_space<vmem>>, vector<1x32x96xbf16>
    %6 = vector.shape_cast %5 : vector<1x32x96xbf16> to vector<32x96xbf16>
    %cst = arith.constant dense<0.000000e+00> : vector<16x96xf32>
    %7 = tpu.matmul %4, %6, %cst {dimension_numbers = #tpu.dot_dimension_numbers<[1], [0], [0], [1], [0, 0, 1, 1], [], []>} : vector<16x32xbf16>, vector<32x96xbf16>, vector<16x96xf32> -> vector<16x96xf32>
    %c0_5 = arith.constant 0 : index
    %c0_6 = arith.constant 0 : index
    %c0_7 = arith.constant 0 : index
    %8 = vector.load %arg7[%c0_5, %c0_6, %c0_7] : memref<1x1x96xf32, #tpu.memory_space<vmem>>, vector<1x1x96xf32>
    %9 = vector.shape_cast %8 : vector<1x1x96xf32> to vector<1x96xf32>
    %10 = vector.broadcast %9 : vector<1x96xf32> to vector<16x96xf32>
    %11 = arith.addf %7, %10 : vector<16x96xf32>
    %12 = vector.extract_strided_slice %11 {offsets = [0, 0], sizes = [16, 32], strides = [1, 1]} : vector<16x96xf32> to vector<16x32xf32>
    %13 = vector.shape_cast %12 : vector<16x32xf32> to vector<2x8x32xf32>
    %14 = vector.extract_strided_slice %11 {offsets = [0, 32], sizes = [16, 32], strides = [1, 1]} : vector<16x96xf32> to vector<16x32xf32>
    %15 = vector.shape_cast %14 : vector<16x32xf32> to vector<2x8x32xf32>
    %16 = vector.extract_strided_slice %11 {offsets = [0, 64], sizes = [16, 32], strides = [1, 1]} : vector<16x96xf32> to vector<16x32xf32>
    %17 = vector.shape_cast %16 : vector<16x32xf32> to vector<2x8x32xf32>
    %c0_8 = arith.constant 0 : index
    %c0_9 = arith.constant 0 : index
    %c0_10 = arith.constant 0 : index
    %18 = vector.load %arg2[%c0_8, %c0_9, %c0_10] : memref<2x1x8xf32, #tpu.memory_space<vmem>>, vector<2x1x8xf32>
    %19 = vector.extract_strided_slice %13 {offsets = [0, 0, 0], sizes = [2, 8, 8], strides = [1, 1, 1]} : vector<2x8x32xf32> to vector<2x8x8xf32>
    %20 = arith.truncf %19 : vector<2x8x8xf32> to vector<2x8x8xbf16>
    %21 = vector.extract_strided_slice %15 {offsets = [0, 0, 0], sizes = [2, 8, 8], strides = [1, 1, 1]} : vector<2x8x32xf32> to vector<2x8x8xf32>
    %22 = arith.truncf %21 : vector<2x8x8xf32> to vector<2x8x8xbf16>
    %23 = vector.extract_strided_slice %17 {offsets = [0, 0, 0], sizes = [2, 8, 8], strides = [1, 1, 1]} : vector<2x8x32xf32> to vector<2x8x8xf32>
    %24 = arith.truncf %23 : vector<2x8x8xf32> to vector<2x8x8xbf16>
    "tpu.trace_start"() <{level = 10 : i32, message = "bqd,bkd->bqk"}> : () -> ()
    %cst_11 = arith.constant dense<0.000000e+00> : vector<2x8x8xf32>
    %25 = tpu.matmul %20, %22, %cst_11 {dimension_numbers = #tpu.dot_dimension_numbers<[2], [2], [1], [1], [0, 0, 0, 1, 1, 1], [0], [0]>} : vector<2x8x8xbf16>, vector<2x8x8xbf16>, vector<2x8x8xf32> -> vector<2x8x8xf32>
    "tpu.trace_stop"() : () -> ()
    %cst_12 = arith.constant 0.353553385 : f32
    %26 = vector.broadcast %cst_12 : f32 to vector<2x8x8xf32>
    %27 = arith.mulf %25, %26 : vector<2x8x8xf32>
    %28 = vector.broadcast %18 : vector<2x1x8xf32> to vector<2x8x8xf32>
    %29 = arith.addf %27, %28 : vector<2x8x8xf32>
    %cst_13 = arith.constant dense<0xFF800000> : vector<2x8xf32>
    %30 = vector.multi_reduction <maximumf>, %29, %cst_13 [2] : vector<2x8x8xf32> to vector<2x8xf32>
    %31 = vector.shape_cast %30 : vector<2x8xf32> to vector<2x8x1xf32>
    %32 = vector.broadcast %31 : vector<2x8x1xf32> to vector<2x8x8xf32>
    %33 = arith.subf %29, %32 : vector<2x8x8xf32>
    %34 = math.exp %33 : vector<2x8x8xf32>
    %cst_14 = arith.constant dense<0.000000e+00> : vector<2x8xf32>
    %35 = vector.multi_reduction <add>, %34, %cst_14 [2] : vector<2x8x8xf32> to vector<2x8xf32>
    %36 = vector.shape_cast %35 : vector<2x8xf32> to vector<2x8x1xf32>
    %37 = tpu.reciprocal %36 {approx = true} : vector<2x8x1xf32> -> vector<2x8x1xf32>
    %38 = vector.broadcast %37 : vector<2x8x1xf32> to vector<2x8x8xf32>
    %39 = arith.mulf %34, %38 : vector<2x8x8xf32>
    %40 = arith.truncf %39 : vector<2x8x8xf32> to vector<2x8x8xbf16>
    "tpu.trace_start"() <{level = 10 : i32, message = "bqk,bkd->bqd"}> : () -> ()
    %cst_15 = arith.constant dense<0.000000e+00> : vector<2x8x8xf32>
    %41 = tpu.matmul %40, %24, %cst_15 {dimension_numbers = #tpu.dot_dimension_numbers<[2], [1], [1], [2], [0, 0, 0, 1, 1, 2], [0], [0]>} : vector<2x8x8xbf16>, vector<2x8x8xbf16>, vector<2x8x8xf32> -> vector<2x8x8xf32>
    "tpu.trace_stop"() : () -> ()
    %42 = vector.extract_strided_slice %13 {offsets = [0, 0, 8], sizes = [2, 8, 8], strides = [1, 1, 1]} : vector<2x8x32xf32> to vector<2x8x8xf32>
    %43 = arith.truncf %42 : vector<2x8x8xf32> to vector<2x8x8xbf16>
    %44 = vector.extract_strided_slice %15 {offsets = [0, 0, 8], sizes = [2, 8, 8], strides = [1, 1, 1]} : vector<2x8x32xf32> to vector<2x8x8xf32>
    %45 = arith.truncf %44 : vector<2x8x8xf32> to vector<2x8x8xbf16>
    %46 = vector.extract_strided_slice %17 {offsets = [0, 0, 8], sizes = [2, 8, 8], strides = [1, 1, 1]} : vector<2x8x32xf32> to vector<2x8x8xf32>
    %47 = arith.truncf %46 : vector<2x8x8xf32> to vector<2x8x8xbf16>
    "tpu.trace_start"() <{level = 10 : i32, message = "bqd,bkd->bqk"}> : () -> ()
    %cst_16 = arith.constant dense<0.000000e+00> : vector<2x8x8xf32>
    %48 = tpu.matmul %43, %45, %cst_16 {dimension_numbers = #tpu.dot_dimension_numbers<[2], [2], [1], [1], [0, 0, 0, 1, 1, 1], [0], [0]>} : vector<2x8x8xbf16>, vector<2x8x8xbf16>, vector<2x8x8xf32> -> vector<2x8x8xf32>
    "tpu.trace_stop"() : () -> ()
    %cst_17 = arith.constant 0.353553385 : f32
    %49 = vector.broadcast %cst_17 : f32 to vector<2x8x8xf32>
    %50 = arith.mulf %48, %49 : vector<2x8x8xf32>
    %51 = vector.broadcast %18 : vector<2x1x8xf32> to vector<2x8x8xf32>
    %52 = arith.addf %50, %51 : vector<2x8x8xf32>
    %cst_18 = arith.constant dense<0xFF800000> : vector<2x8xf32>
    %53 = vector.multi_reduction <maximumf>, %52, %cst_18 [2] : vector<2x8x8xf32> to vector<2x8xf32>
    %54 = vector.shape_cast %53 : vector<2x8xf32> to vector<2x8x1xf32>
    %55 = vector.broadcast %54 : vector<2x8x1xf32> to vector<2x8x8xf32>
    %56 = arith.subf %52, %55 : vector<2x8x8xf32>
    %57 = math.exp %56 : vector<2x8x8xf32>
    %cst_19 = arith.constant dense<0.000000e+00> : vector<2x8xf32>
    %58 = vector.multi_reduction <add>, %57, %cst_19 [2] : vector<2x8x8xf32> to vector<2x8xf32>
    %59 = vector.shape_cast %58 : vector<2x8xf32> to vector<2x8x1xf32>
    %60 = tpu.reciprocal %59 {approx = true} : vector<2x8x1xf32> -> vector<2x8x1xf32>
    %61 = vector.broadcast %60 : vector<2x8x1xf32> to vector<2x8x8xf32>
    %62 = arith.mulf %57, %61 : vector<2x8x8xf32>
    %63 = arith.truncf %62 : vector<2x8x8xf32> to vector<2x8x8xbf16>
    "tpu.trace_start"() <{level = 10 : i32, message = "bqk,bkd->bqd"}> : () -> ()
    %cst_20 = arith.constant dense<0.000000e+00> : vector<2x8x8xf32>
    %64 = tpu.matmul %63, %47, %cst_20 {dimension_numbers = #tpu.dot_dimension_numbers<[2], [1], [1], [2], [0, 0, 0, 1, 1, 2], [0], [0]>} : vector<2x8x8xbf16>, vector<2x8x8xbf16>, vector<2x8x8xf32> -> vector<2x8x8xf32>
    "tpu.trace_stop"() : () -> ()
    %65 = vector.extract_strided_slice %13 {offsets = [0, 0, 16], sizes = [2, 8, 8], strides = [1, 1, 1]} : vector<2x8x32xf32> to vector<2x8x8xf32>
    %66 = arith.truncf %65 : vector<2x8x8xf32> to vector<2x8x8xbf16>
    %67 = vector.extract_strided_slice %15 {offsets = [0, 0, 16], sizes = [2, 8, 8], strides = [1, 1, 1]} : vector<2x8x32xf32> to vector<2x8x8xf32>
    %68 = arith.truncf %67 : vector<2x8x8xf32> to vector<2x8x8xbf16>
    %69 = vector.extract_strided_slice %17 {offsets = [0, 0, 16], sizes = [2, 8, 8], strides = [1, 1, 1]} : vector<2x8x32xf32> to vector<2x8x8xf32>
    %70 = arith.truncf %69 : vector<2x8x8xf32> to vector<2x8x8xbf16>
    "tpu.trace_start"() <{level = 10 : i32, message = "bqd,bkd->bqk"}> : () -> ()
    %cst_21 = arith.constant dense<0.000000e+00> : vector<2x8x8xf32>
    %71 = tpu.matmul %66, %68, %cst_21 {dimension_numbers = #tpu.dot_dimension_numbers<[2], [2], [1], [1], [0, 0, 0, 1, 1, 1], [0], [0]>} : vector<2x8x8xbf16>, vector<2x8x8xbf16>, vector<2x8x8xf32> -> vector<2x8x8xf32>
    "tpu.trace_stop"() : () -> ()
    %cst_22 = arith.constant 0.353553385 : f32
    %72 = vector.broadcast %cst_22 : f32 to vector<2x8x8xf32>
    %73 = arith.mulf %71, %72 : vector<2x8x8xf32>
    %74 = vector.broadcast %18 : vector<2x1x8xf32> to vector<2x8x8xf32>
    %75 = arith.addf %73, %74 : vector<2x8x8xf32>
    %cst_23 = arith.constant dense<0xFF800000> : vector<2x8xf32>
    %76 = vector.multi_reduction <maximumf>, %75, %cst_23 [2] : vector<2x8x8xf32> to vector<2x8xf32>
    %77 = vector.shape_cast %76 : vector<2x8xf32> to vector<2x8x1xf32>
    %78 = vector.broadcast %77 : vector<2x8x1xf32> to vector<2x8x8xf32>
    %79 = arith.subf %75, %78 : vector<2x8x8xf32>
    %80 = math.exp %79 : vector<2x8x8xf32>
    %cst_24 = arith.constant dense<0.000000e+00> : vector<2x8xf32>
    %81 = vector.multi_reduction <add>, %80, %cst_24 [2] : vector<2x8x8xf32> to vector<2x8xf32>
    %82 = vector.shape_cast %81 : vector<2x8xf32> to vector<2x8x1xf32>
    %83 = tpu.reciprocal %82 {approx = true} : vector<2x8x1xf32> -> vector<2x8x1xf32>
    %84 = vector.broadcast %83 : vector<2x8x1xf32> to vector<2x8x8xf32>
    %85 = arith.mulf %80, %84 : vector<2x8x8xf32>
    %86 = arith.truncf %85 : vector<2x8x8xf32> to vector<2x8x8xbf16>
    "tpu.trace_start"() <{level = 10 : i32, message = "bqk,bkd->bqd"}> : () -> ()
    %cst_25 = arith.constant dense<0.000000e+00> : vector<2x8x8xf32>
    %87 = tpu.matmul %86, %70, %cst_25 {dimension_numbers = #tpu.dot_dimension_numbers<[2], [1], [1], [2], [0, 0, 0, 1, 1, 2], [0], [0]>} : vector<2x8x8xbf16>, vector<2x8x8xbf16>, vector<2x8x8xf32> -> vector<2x8x8xf32>
    "tpu.trace_stop"() : () -> ()
    %88 = vector.extract_strided_slice %13 {offsets = [0, 0, 24], sizes = [2, 8, 8], strides = [1, 1, 1]} : vector<2x8x32xf32> to vector<2x8x8xf32>
    %89 = arith.truncf %88 : vector<2x8x8xf32> to vector<2x8x8xbf16>
    %90 = vector.extract_strided_slice %15 {offsets = [0, 0, 24], sizes = [2, 8, 8], strides = [1, 1, 1]} : vector<2x8x32xf32> to vector<2x8x8xf32>
    %91 = arith.truncf %90 : vector<2x8x8xf32> to vector<2x8x8xbf16>
    %92 = vector.extract_strided_slice %17 {offsets = [0, 0, 24], sizes = [2, 8, 8], strides = [1, 1, 1]} : vector<2x8x32xf32> to vector<2x8x8xf32>
    %93 = arith.truncf %92 : vector<2x8x8xf32> to vector<2x8x8xbf16>
    "tpu.trace_start"() <{level = 10 : i32, message = "bqd,bkd->bqk"}> : () -> ()
    %cst_26 = arith.constant dense<0.000000e+00> : vector<2x8x8xf32>
    %94 = tpu.matmul %89, %91, %cst_26 {dimension_numbers = #tpu.dot_dimension_numbers<[2], [2], [1], [1], [0, 0, 0, 1, 1, 1], [0], [0]>} : vector<2x8x8xbf16>, vector<2x8x8xbf16>, vector<2x8x8xf32> -> vector<2x8x8xf32>
    "tpu.trace_stop"() : () -> ()
    %cst_27 = arith.constant 0.353553385 : f32
    %95 = vector.broadcast %cst_27 : f32 to vector<2x8x8xf32>
    %96 = arith.mulf %94, %95 : vector<2x8x8xf32>
    %97 = vector.broadcast %18 : vector<2x1x8xf32> to vector<2x8x8xf32>
    %98 = arith.addf %96, %97 : vector<2x8x8xf32>
    %cst_28 = arith.constant dense<0xFF800000> : vector<2x8xf32>
    %99 = vector.multi_reduction <maximumf>, %98, %cst_28 [2] : vector<2x8x8xf32> to vector<2x8xf32>
    %100 = vector.shape_cast %99 : vector<2x8xf32> to vector<2x8x1xf32>
    %101 = vector.broadcast %100 : vector<2x8x1xf32> to vector<2x8x8xf32>
    %102 = arith.subf %98, %101 : vector<2x8x8xf32>
    %103 = math.exp %102 : vector<2x8x8xf32>
    %cst_29 = arith.constant dense<0.000000e+00> : vector<2x8xf32>
    %104 = vector.multi_reduction <add>, %103, %cst_29 [2] : vector<2x8x8xf32> to vector<2x8xf32>
    %105 = vector.shape_cast %104 : vector<2x8xf32> to vector<2x8x1xf32>
    %106 = tpu.reciprocal %105 {approx = true} : vector<2x8x1xf32> -> vector<2x8x1xf32>
    %107 = vector.broadcast %106 : vector<2x8x1xf32> to vector<2x8x8xf32>
    %108 = arith.mulf %103, %107 : vector<2x8x8xf32>
    %109 = arith.truncf %108 : vector<2x8x8xf32> to vector<2x8x8xbf16>
    "tpu.trace_start"() <{level = 10 : i32, message = "bqk,bkd->bqd"}> : () -> ()
    %cst_30 = arith.constant dense<0.000000e+00> : vector<2x8x8xf32>
    %110 = tpu.matmul %109, %93, %cst_30 {dimension_numbers = #tpu.dot_dimension_numbers<[2], [1], [1], [2], [0, 0, 0, 1, 1, 2], [0], [0]>} : vector<2x8x8xbf16>, vector<2x8x8xbf16>, vector<2x8x8xf32> -> vector<2x8x8xf32>
    "tpu.trace_stop"() : () -> ()
    %111 = tpu.concatenate %41, %64, %87, %110 in 2 : vector<2x8x8xf32>, vector<2x8x8xf32>, vector<2x8x8xf32>, vector<2x8x8xf32> -> vector<2x8x32xf32>
    %112 = vector.shape_cast %111 : vector<2x8x32xf32> to vector<16x32xf32>
    %113 = arith.truncf %112 : vector<16x32xf32> to vector<16x32xbf16>
    %c0_31 = arith.constant 0 : index
    %c0_32 = arith.constant 0 : index
    %c0_33 = arith.constant 0 : index
    %114 = vector.load %arg8[%c0_31, %c0_32, %c0_33] : memref<1x32x32xbf16, #tpu.memory_space<vmem>>, vector<1x32x32xbf16>
    %115 = vector.shape_cast %114 : vector<1x32x32xbf16> to vector<32x32xbf16>
    %cst_34 = arith.constant dense<0.000000e+00> : vector<16x32xf32>
    %116 = tpu.matmul %113, %115, %cst_34 {dimension_numbers = #tpu.dot_dimension_numbers<[1], [0], [0], [1], [0, 0, 1, 1], [], []>} : vector<16x32xbf16>, vector<32x32xbf16>, vector<16x32xf32> -> vector<16x32xf32>
    %c0_35 = arith.constant 0 : index
    %c0_36 = arith.constant 0 : index
    %c0_37 = arith.constant 0 : index
    %117 = vector.load %arg9[%c0_35, %c0_36, %c0_37] : memref<1x1x32xf32, #tpu.memory_space<vmem>>, vector<1x1x32xf32>
    %118 = vector.shape_cast %117 : vector<1x1x32xf32> to vector<1x32xf32>
    %119 = vector.broadcast %118 : vector<1x32xf32> to vector<16x32xf32>
    %120 = arith.addf %116, %119 : vector<16x32xf32>
    %121 = arith.addf %120, %3 : vector<16x32xf32>
    %c0_38 = arith.constant 0 : index
    %c0_39 = arith.constant 0 : index
    %c0_40 = arith.constant 0 : index
    %122 = vector.load %arg10[%c0_38, %c0_39, %c0_40] : memref<1x1x32xf32, #tpu.memory_space<vmem>>, vector<1x1x32xf32>
    %123 = vector.shape_cast %122 : vector<1x1x32xf32> to vector<1x32xf32>
    %c0_41 = arith.constant 0 : index
    %c0_42 = arith.constant 0 : index
    %c0_43 = arith.constant 0 : index
    %124 = vector.load %arg11[%c0_41, %c0_42, %c0_43] : memref<1x1x32xf32, #tpu.memory_space<vmem>>, vector<1x1x32xf32>
    %125 = vector.shape_cast %124 : vector<1x1x32xf32> to vector<1x32xf32>
    %cst_44 = arith.constant dense<0.000000e+00> : vector<16xf32>
    %126 = vector.multi_reduction <add>, %121, %cst_44 [1] : vector<16x32xf32> to vector<16xf32>
    %127 = vector.shape_cast %126 : vector<16xf32> to vector<16x1xf32>
    %cst_45 = arith.constant 3.200000e+01 : f32
    %128 = vector.broadcast %cst_45 : f32 to vector<16x1xf32>
    %129 = arith.divf %127, %128 : vector<16x1xf32>
    %130 = vector.broadcast %129 : vector<16x1xf32> to vector<16x32xf32>
    %131 = arith.subf %121, %130 : vector<16x32xf32>
    %132 = arith.mulf %131, %131 : vector<16x32xf32>
    %cst_46 = arith.constant dense<0.000000e+00> : vector<16xf32>
    %133 = vector.multi_reduction <add>, %132, %cst_46 [1] : vector<16x32xf32> to vector<16xf32>
    %134 = vector.shape_cast %133 : vector<16xf32> to vector<16x1xf32>
    %cst_47 = arith.constant 3.200000e+01 : f32
    %135 = vector.broadcast %cst_47 : f32 to vector<16x1xf32>
    %136 = arith.divf %134, %135 : vector<16x1xf32>
    %cst_48 = arith.constant 9.99999996E-13 : f32
    %137 = vector.broadcast %cst_48 : f32 to vector<16x1xf32>
    %138 = arith.addf %136, %137 : vector<16x1xf32>
    %139 = math.rsqrt %138 : vector<16x1xf32>
    %140 = vector.broadcast %139 : vector<16x1xf32> to vector<16x32xf32>
    %141 = arith.mulf %131, %140 : vector<16x32xf32>
    %142 = vector.broadcast %123 : vector<1x32xf32> to vector<16x32xf32>
    %143 = arith.mulf %141, %142 : vector<16x32xf32>
    %144 = vector.broadcast %125 : vector<1x32xf32> to vector<16x32xf32>
    %145 = arith.addf %143, %144 : vector<16x32xf32>
    %146 = arith.truncf %145 : vector<16x32xf32> to vector<16x32xbf16>
    %c0_49 = arith.constant 0 : index
    %c0_50 = arith.constant 0 : index
    %c0_51 = arith.constant 0 : index
    %147 = vector.load %arg12[%c0_49, %c0_50, %c0_51] : memref<1x32x64xbf16, #tpu.memory_space<vmem>>, vector<1x32x64xbf16>
    %148 = vector.shape_cast %147 : vector<1x32x64xbf16> to vector<32x64xbf16>
    %cst_52 = arith.constant dense<0.000000e+00> : vector<16x64xf32>
    %149 = tpu.matmul %146, %148, %cst_52 {dimension_numbers = #tpu.dot_dimension_numbers<[1], [0], [0], [1], [0, 0, 1, 1], [], []>} : vector<16x32xbf16>, vector<32x64xbf16>, vector<16x64xf32> -> vector<16x64xf32>
    %c0_53 = arith.constant 0 : index
    %c0_54 = arith.constant 0 : index
    %c0_55 = arith.constant 0 : index
    %150 = vector.load %arg13[%c0_53, %c0_54, %c0_55] : memref<1x1x64xf32, #tpu.memory_space<vmem>>, vector<1x1x64xf32>
    %151 = vector.shape_cast %150 : vector<1x1x64xf32> to vector<1x64xf32>
    %152 = vector.broadcast %151 : vector<1x64xf32> to vector<16x64xf32>
    %153 = arith.addf %149, %152 : vector<16x64xf32>
    %cst_56 = arith.constant 5.000000e-01 : f32
    %154 = vector.broadcast %cst_56 : f32 to vector<16x64xf32>
    %155 = arith.mulf %154, %153 : vector<16x64xf32>
    %cst_57 = arith.constant 4.471500e-02 : f32
    %156 = vector.broadcast %cst_57 : f32 to vector<16x64xf32>
    %157 = arith.mulf %156, %153 : vector<16x64xf32>
    %158 = arith.mulf %157, %153 : vector<16x64xf32>
    %159 = arith.mulf %158, %153 : vector<16x64xf32>
    %160 = arith.addf %153, %159 : vector<16x64xf32>
    %cst_58 = arith.constant 0.797884583 : f32
    %161 = vector.broadcast %cst_58 : f32 to vector<16x64xf32>
    %162 = arith.mulf %161, %160 : vector<16x64xf32>
    %163 = math.tanh %162 : vector<16x64xf32>
    %cst_59 = arith.constant 1.000000e+00 : f32
    %164 = vector.broadcast %cst_59 : f32 to vector<16x64xf32>
    %165 = arith.addf %164, %163 : vector<16x64xf32>
    %166 = arith.mulf %155, %165 : vector<16x64xf32>
    %167 = arith.truncf %166 : vector<16x64xf32> to vector<16x64xbf16>
    %c0_60 = arith.constant 0 : index
    %c0_61 = arith.constant 0 : index
    %c0_62 = arith.constant 0 : index
    %168 = vector.load %arg14[%c0_60, %c0_61, %c0_62] : memref<1x64x32xbf16, #tpu.memory_space<vmem>>, vector<1x64x32xbf16>
    %169 = vector.shape_cast %168 : vector<1x64x32xbf16> to vector<64x32xbf16>
    %cst_63 = arith.constant dense<0.000000e+00> : vector<16x32xf32>
    %170 = tpu.matmul %167, %169, %cst_63 {dimension_numbers = #tpu.dot_dimension_numbers<[1], [0], [0], [1], [0, 0, 1, 1], [], []>} : vector<16x64xbf16>, vector<64x32xbf16>, vector<16x32xf32> -> vector<16x32xf32>
    %c0_64 = arith.constant 0 : index
    %c0_65 = arith.constant 0 : index
    %c0_66 = arith.constant 0 : index
    %171 = vector.load %arg15[%c0_64, %c0_65, %c0_66] : memref<1x1x32xf32, #tpu.memory_space<vmem>>, vector<1x1x32xf32>
    %172 = vector.shape_cast %171 : vector<1x1x32xf32> to vector<1x32xf32>
    %173 = vector.broadcast %172 : vector<1x32xf32> to vector<16x32xf32>
    %174 = arith.addf %170, %173 : vector<16x32xf32>
    %175 = arith.addf %174, %145 : vector<16x32xf32>
    %c0_67 = arith.constant 0 : index
    %c0_68 = arith.constant 0 : index
    %c0_69 = arith.constant 0 : index
    %176 = vector.load %arg16[%c0_67, %c0_68, %c0_69] : memref<1x1x32xf32, #tpu.memory_space<vmem>>, vector<1x1x32xf32>
    %177 = vector.shape_cast %176 : vector<1x1x32xf32> to vector<1x32xf32>
    %c0_70 = arith.constant 0 : index
    %c0_71 = arith.constant 0 : index
    %c0_72 = arith.constant 0 : index
    %178 = vector.load %arg17[%c0_70, %c0_71, %c0_72] : memref<1x1x32xf32, #tpu.memory_space<vmem>>, vector<1x1x32xf32>
    %179 = vector.shape_cast %178 : vector<1x1x32xf32> to vector<1x32xf32>
    %cst_73 = arith.constant dense<0.000000e+00> : vector<16xf32>
    %180 = vector.multi_reduction <add>, %175, %cst_73 [1] : vector<16x32xf32> to vector<16xf32>
    %181 = vector.shape_cast %180 : vector<16xf32> to vector<16x1xf32>
    %cst_74 = arith.constant 3.200000e+01 : f32
    %182 = vector.broadcast %cst_74 : f32 to vector<16x1xf32>
    %183 = arith.divf %181, %182 : vector<16x1xf32>
    %184 = vector.broadcast %183 : vector<16x1xf32> to vector<16x32xf32>
    %185 = arith.subf %175, %184 : vector<16x32xf32>
    %186 = arith.mulf %185, %185 : vector<16x32xf32>
    %cst_75 = arith.constant dense<0.000000e+00> : vector<16xf32>
    %187 = vector.multi_reduction <add>, %186, %cst_75 [1] : vector<16x32xf32> to vector<16xf32>
    %188 = vector.shape_cast %187 : vector<16xf32> to vector<16x1xf32>
    %cst_76 = arith.constant 3.200000e+01 : f32
    %189 = vector.broadcast %cst_76 : f32 to vector<16x1xf32>
    %190 = arith.divf %188, %189 : vector<16x1xf32>
    %cst_77 = arith.constant 9.99999996E-13 : f32
    %191 = vector.broadcast %cst_77 : f32 to vector<16x1xf32>
    %192 = arith.addf %190, %191 : vector<16x1xf32>
    %193 = math.rsqrt %192 : vector<16x1xf32>
    %194 = vector.broadcast %193 : vector<16x1xf32> to vector<16x32xf32>
    %195 = arith.mulf %185, %194 : vector<16x32xf32>
    %196 = vector.broadcast %177 : vector<1x32xf32> to vector<16x32xf32>
    %197 = arith.mulf %195, %196 : vector<16x32xf32>
    %198 = vector.broadcast %179 : vector<1x32xf32> to vector<16x32xf32>
    %199 = arith.addf %197, %198 : vector<16x32xf32>
    %c0_78 = arith.constant 0 : index
    %c0_79 = arith.constant 0 : index
    %200 = vector.load %arg21[%c0_78, %c0_79] : memref<16x32xf32, #tpu.memory_space<vmem>>, vector<16x32xf32>
    tpu.vector_store %arg21[%c0_78, %c0_79], %199 {strides = array<i32>} : memref<16x32xf32, #tpu.memory_space<vmem>>, vector<16x32xf32>,
    %c1_i32 = arith.constant 1 : i32
    %201 = arith.cmpi eq, %arg0, %c1_i32 : i32
    %202 = arith.extui %201 : i1 to i32
    %c0_i32_80 = arith.constant 0 : i32
    %203 = arith.cmpi ne, %202, %c0_i32_80 : i32
    scf.if %203 {
      %c0_81 = arith.constant 0 : index
      %c0_82 = arith.constant 0 : index
      %204 = vector.load %arg3[%c0_81, %c0_82] : memref<2x16xbf16, #tpu.memory_space<vmem>>, vector<2x16xbf16>
      %205 = arith.truncf %199 : vector<16x32xf32> to vector<16x32xbf16>
      %cst_83 = arith.constant dense<0.000000e+00> : vector<2x32xf32>
      %206 = tpu.matmul %204, %205, %cst_83 {dimension_numbers = #tpu.dot_dimension_numbers<[1], [0], [0], [1], [0, 0, 1, 1], [], []>} : vector<2x16xbf16>, vector<16x32xbf16>, vector<2x32xf32> -> vector<2x32xf32>
      %207 = arith.truncf %206 : vector<2x32xf32> to vector<2x32xbf16>
      %c0_84 = arith.constant 0 : index
      %c0_85 = arith.constant 0 : index
      %208 = vector.load %arg18[%c0_84, %c0_85] : memref<32x16xbf16, #tpu.memory_space<vmem>>, vector<32x16xbf16>
      %cst_86 = arith.constant dense<0.000000e+00> : vector<2x16xf32>
      %209 = tpu.matmul %207, %208, %cst_86 {dimension_numbers = #tpu.dot_dimension_numbers<[1], [0], [0], [1], [0, 0, 1, 1], [], []>} : vector<2x32xbf16>, vector<32x16xbf16>, vector<2x16xf32> -> vector<2x16xf32>
      %c0_87 = arith.constant 0 : index
      %c0_88 = arith.constant 0 : index
      %210 = vector.load %arg19[%c0_87, %c0_88] : memref<1x16xf32, #tpu.memory_space<vmem>>, vector<1x16xf32>
      %211 = vector.broadcast %210 : vector<1x16xf32> to vector<2x16xf32>
      %212 = arith.addf %209, %211 : vector<2x16xf32>
      %c0_89 = arith.constant 0 : index
      %c0_90 = arith.constant 0 : index
      %213 = vector.load %arg20[%c0_89, %c0_90] : memref<2x16xf32, #tpu.memory_space<vmem>>, vector<2x16xf32>
      tpu.vector_store %arg20[%c0_89, %c0_90], %212 {strides = array<i32>} : memref<2x16xf32, #tpu.memory_space<vmem>>, vector<2x16xf32>,
    } else {
    }
    return
  }
  func.func @transform_0(%arg0: i32) -> (i32, i32) {
    %c0_i32 = arith.constant 0 : i32
    %c0_i32_0 = arith.constant 0 : i32
    %c0_i32_1 = arith.constant 0 : i32
    return %c0_i32, %c0_i32_0 : i32, i32
  }
  func.func @transform_1(%arg0: i32) -> (i32, i32, i32) {
    %c0_i32 = arith.constant 0 : i32
    %c0_i32_0 = arith.constant 0 : i32
    %c0_i32_1 = arith.constant 0 : i32
    %c0_i32_2 = arith.constant 0 : i32
    return %c0_i32, %c0_i32_0, %c0_i32_1 : i32, i32, i32
  }
  func.func @transform_2(%arg0: i32) -> (i32, i32) {
    %c0_i32 = arith.constant 0 : i32
    %c0_i32_0 = arith.constant 0 : i32
    %c0_i32_1 = arith.constant 0 : i32
    return %c0_i32, %c0_i32_0 : i32, i32
  }
  func.func @transform_3(%arg0: i32) -> (i32, i32) {
    %c0_i32 = arith.constant 0 : i32
    %c0_i32_0 = arith.constant 0 : i32
    %c0_i32_1 = arith.constant 0 : i32
    return %c0_i32, %c0_i32_0 : i32, i32
  }
  func.func @transform_4(%arg0: i32) -> (i32, i32) {
    %c0_i32 = arith.constant 0 : i32
    %c0_i32_0 = arith.constant 0 : i32
    %c0_i32_1 = arith.constant 0 : i32
    return %c0_i32, %c0_i32_0 : i32, i32
  }
  func.func @transform_5(%arg0: i32) -> (i32, i32, i32) {
    %c0_i32 = arith.constant 0 : i32
    %c0_i32_0 = arith.constant 0 : i32
    %c0_i32_1 = arith.constant 0 : i32
    return %arg0, %c0_i32, %c0_i32_0 : i32, i32, i32
  }
  func.func @transform_6(%arg0: i32) -> (i32, i32, i32) {
    %c0_i32 = arith.constant 0 : i32
    %c0_i32_0 = arith.constant 0 : i32
    %c0_i32_1 = arith.constant 0 : i32
    return %arg0, %c0_i32, %c0_i32_0 : i32, i32, i32
  }
  func.func @transform_7(%arg0: i32) -> (i32, i32, i32) {
    %c0_i32 = arith.constant 0 : i32
    %c0_i32_0 = arith.constant 0 : i32
    %c0_i32_1 = arith.constant 0 : i32
    return %arg0, %c0_i32, %c0_i32_0 : i32, i32, i32
  }
  func.func @transform_8(%arg0: i32) -> (i32, i32, i32) {
    %c0_i32 = arith.constant 0 : i32
    %c0_i32_0 = arith.constant 0 : i32
    %c0_i32_1 = arith.constant 0 : i32
    return %arg0, %c0_i32, %c0_i32_0 : i32, i32, i32
  }
  func.func @transform_9(%arg0: i32) -> (i32, i32, i32) {
    %c0_i32 = arith.constant 0 : i32
    %c0_i32_0 = arith.constant 0 : i32
    %c0_i32_1 = arith.constant 0 : i32
    return %arg0, %c0_i32, %c0_i32_0 : i32, i32, i32
  }
  func.func @transform_10(%arg0: i32) -> (i32, i32, i32) {
    %c0_i32 = arith.constant 0 : i32
    %c0_i32_0 = arith.constant 0 : i32
    %c0_i32_1 = arith.constant 0 : i32
    return %arg0, %c0_i32, %c0_i32_0 : i32, i32, i32
  }
  func.func @transform_11(%arg0: i32) -> (i32, i32, i32) {
    %c0_i32 = arith.constant 0 : i32
    %c0_i32_0 = arith.constant 0 : i32
    %c0_i32_1 = arith.constant 0 : i32
    return %arg0, %c0_i32, %c0_i32_0 : i32, i32, i32
  }
  func.func @transform_12(%arg0: i32) -> (i32, i32, i32) {
    %c0_i32 = arith.constant 0 : i32
    %c0_i32_0 = arith.constant 0 : i32
    %c0_i32_1 = arith.constant 0 : i32
    return %arg0, %c0_i32, %c0_i32_0 : i32, i32, i32
  }
  func.func @transform_13(%arg0: i32) -> (i32, i32, i32) {
    %c0_i32 = arith.constant 0 : i32
    %c0_i32_0 = arith.constant 0 : i32
    %c0_i32_1 = arith.constant 0 : i32
    return %arg0, %c0_i32, %c0_i32_0 : i32, i32, i32
  }
  func.func @transform_14(%arg0: i32) -> (i32, i32, i32) {
    %c0_i32 = arith.constant 0 : i32
    %c0_i32_0 = arith.constant 0 : i32
    %c0_i32_1 = arith.constant 0 : i32
    return %arg0, %c0_i32, %c0_i32_0 : i32, i32, i32
  }
  func.func @transform_15(%arg0: i32) -> (i32, i32, i32) {
    %c0_i32 = arith.constant 0 : i32
    %c0_i32_0 = arith.constant 0 : i32
    %c0_i32_1 = arith.constant 0 : i32
    return %arg0, %c0_i32, %c0_i32_0 : i32, i32, i32
  }
  func.func @transform_16(%arg0: i32) -> (i32, i32, i32) {
    %c0_i32 = arith.constant 0 : i32
    %c0_i32_0 = arith.constant 0 : i32
    %c0_i32_1 = arith.constant 0 : i32
    return %arg0, %c0_i32, %c0_i32_0 : i32, i32, i32
  }
  func.func @transform_17(%arg0: i32) -> (i32, i32) {
    %c0_i32 = arith.constant 0 : i32
    %c0_i32_0 = arith.constant 0 : i32
    %c0_i32_1 = arith.constant 0 : i32
    return %c0_i32, %c0_i32_0 : i32, i32
  }
  func.func @transform_18(%arg0: i32) -> (i32, i32) {
    %c0_i32 = arith.constant 0 : i32
    %c0_i32_0 = arith.constant 0 : i32
    %c0_i32_1 = arith.constant 0 : i32
    return %c0_i32, %c0_i32_0 : i32, i32
  }
  func.func @transform_19(%arg0: i32) -> (i32, i32) {
    %c0_i32 = arith.constant 0 : i32
    %c0_i32_0 = arith.constant 0 : i32
    %c0_i32_1 = arith.constant 0 : i32
    return %c0_i32, %c0_i32_0 : i32, i32
  }
}

</mosaic_0001>

<llo_original>
// kernel: basic_bert_unit_forward.1
$region0: #{basic_bert_unit_forward.1}
  #allocation0 [shape = 'u32[]', space=smem, size = 0x4, offset = 0x4, fixed_abs, tag = 'smem constant byte address 0x4 - core index']
  #allocation1 [shape = 'u32[144,128]{1,0:T(1,128)}', space=vmem, size = 0x12000, scoped, tag = 'internal scratch']
  #allocation2 [shape = 'f32[16,32]{1,0:T(8,128)}', space=vmem, size = 0x2000, scoped, tag = 'scratch operand']
  %s0 = inlined_call_operand.vmem [shape: f32[16,32], index: 0, kind: input, shape index: {}]
  %s1 = inlined_call_operand.vmem [shape: f32[2,1,8], index: 1, kind: input, shape index: {}]
  %s2 = inlined_call_operand.vmem [shape: bf16[2,16], index: 2, kind: input, shape index: {}]
  %s3 = inlined_call_operand.vmem [shape: f32[1,32], index: 3, kind: input, shape index: {}]
  %s4 = inlined_call_operand.vmem [shape: f32[1,32], index: 4, kind: input, shape index: {}]
  %s5 = inlined_call_operand.vmem [shape: bf16[2,32,96], index: 5, kind: input, shape index: {}]
  %s6 = inlined_call_operand.vmem [shape: f32[2,1,96], index: 6, kind: input, shape index: {}]
  %s7 = inlined_call_operand.vmem [shape: bf16[2,32,32], index: 7, kind: input, shape index: {}]
  %s8 = inlined_call_operand.vmem [shape: f32[2,1,32], index: 8, kind: input, shape index: {}]
  %s9 = inlined_call_operand.vmem [shape: f32[2,1,32], index: 9, kind: input, shape index: {}]
  %s10 = inlined_call_operand.vmem [shape: f32[2,1,32], index: 10, kind: input, shape index: {}]
  %s11 = inlined_call_operand.vmem [shape: bf16[2,32,64], index: 11, kind: input, shape index: {}]
  %s12 = inlined_call_operand.vmem [shape: f32[2,1,64], index: 12, kind: input, shape index: {}]
  %s13 = inlined_call_operand.vmem [shape: bf16[2,64,32], index: 13, kind: input, shape index: {}]
  %s14 = inlined_call_operand.vmem [shape: f32[2,1,32], index: 14, kind: input, shape index: {}]
  %s15 = inlined_call_operand.vmem [shape: f32[2,1,32], index: 15, kind: input, shape index: {}]
  %s16 = inlined_call_operand.vmem [shape: f32[2,1,32], index: 16, kind: input, shape index: {}]
  %s17 = inlined_call_operand.vmem [shape: bf16[32,16], index: 17, kind: input, shape index: {}]
  %s18 = inlined_call_operand.vmem [shape: f32[1,16], index: 18, kind: input, shape index: {}]
  %s19 = inlined_call_operand.hbm [shape: f32[2,16], index: 19, kind: output, shape index: {}]
  %s20 = sld [smem:[#allocation0]]
  $region117: #{basic_bert_unit_forward.1} parent=0
    _
  %s22 = ssub.s32 1, %s20
  %s23 = scalar_select 0, %s22, %s20
  $region1: #{basic_bert_unit_forward.1} parent=0
    #allocation3 [shape = 'u8[1024]{0}', space=vmem, size = 0x400, scoped, tag = 'output window, operand 0, single buffered']
    #allocation4 [shape = 's32[2]{0}', space=sflag, size = 0x8, scoped, tag = 'scoped memory for basic_bert_unit_forward.1']
    %24 = vsyncpa [#allocation4], 0
    loop: start=0, step=1, limit=4
    $region2: #{basic_bert_unit_forward.1} parent=1 // loop_pre_header
      _
    $region3: #{basic_bert_unit_forward.1} parent=1 // loop_header
      %s26 = sphi 0, %s30
      %p27 = scmp.ge.s32.totalorder %s26, 4
      %s34 = sphi 0, %s34
      %s36 = sphi 0, %s34
      %s37 = sphi 0, %s36
      %s51 = sphi 0, %s37
      %s55 = sphi 0, %s55
      %s57 = sphi 0, %s55
      %s58 = sphi 0, %s57
      %s72 = sphi 0, %s58
      %s76 = sphi 0, %s76
      %s78 = sphi 0, %s76
      %s79 = sphi 0, %s78
      %s93 = sphi 0, %s79
      %s97 = sphi 0, %s97
      %s99 = sphi 0, %s97
      %s100 = sphi 0, %s99
      %s114 = sphi 0, %s100
      %s118 = sphi 0, %s118
      %s120 = sphi 0, %s118
      %s121 = sphi 0, %s120
      %s135 = sphi 0, %s121
      %s141 = sphi 0, %s143
      %s144 = sphi 0, %s141
      %s145 = sphi 0, %s144
      %s161 = sphi 0, %s145
      %s167 = sphi 0, %s169
      %s170 = sphi 0, %s167
      %s171 = sphi 0, %s170
      %s187 = sphi 0, %s171
      %s193 = sphi 0, %s195
      %s196 = sphi 0, %s193
      %s197 = sphi 0, %s196
      %s213 = sphi 0, %s197
      %s219 = sphi 0, %s221
      %s222 = sphi 0, %s219
      %s223 = sphi 0, %s222
      %s239 = sphi 0, %s223
      %s245 = sphi 0, %s247
      %s248 = sphi 0, %s245
      %s249 = sphi 0, %s248
      %s265 = sphi 0, %s249
      %s271 = sphi 0, %s273
      %s274 = sphi 0, %s271
      %s275 = sphi 0, %s274
      %s291 = sphi 0, %s275
      %s297 = sphi 0, %s299
      %s300 = sphi 0, %s297
      %s301 = sphi 0, %s300
      %s317 = sphi 0, %s301
      %s323 = sphi 0, %s325
      %s326 = sphi 0, %s323
      %s327 = sphi 0, %s326
      %s343 = sphi 0, %s327
      %s349 = sphi 0, %s351
      %s352 = sphi 0, %s349
      %s353 = sphi 0, %s352
      %s369 = sphi 0, %s353
      %s375 = sphi 0, %s377
      %s378 = sphi 0, %s375
      %s379 = sphi 0, %s378
      %s395 = sphi 0, %s379
      %s401 = sphi 0, %s403
      %s404 = sphi 0, %s401
      %s405 = sphi 0, %s404
      %s421 = sphi 0, %s405
      %s427 = sphi 0, %s429
      %s430 = sphi 0, %s427
      %s431 = sphi 0, %s430
      %s447 = sphi 0, %s431
      %s451 = sphi 0, %s451
      %s453 = sphi 0, %s451
      %s454 = sphi 0, %s453
      %s468 = sphi 0, %s454
      %s472 = sphi 0, %s472
      %s474 = sphi 0, %s472
      %s475 = sphi 0, %s474
      %s489 = sphi 0, %s475
      %s493 = sphi 0, %s493
      %s495 = sphi 0, %s493
      %s496 = sphi 0, %s495
      %s510 = sphi 0, %s496
    $region4: #{basic_bert_unit_forward.1} parent=1 // loop_header_branch
      %29 = sbr.rel (%p27) target = $region8
    $region5: #{basic_bert_unit_forward.1} parent=1 // loop_body
      %s31 = ssub.s32 %s26, 1
      %s32 = ssub.s32 %s26, 2
      %s33 = sadd.s32 %s26, 1
      %s35 = sadd.s32 %s34, 1
      %p38 = scmp.eq.s32.totalorder %s26, 1
      %p39 = scmp.ne.s32.totalorder %s34, %s36
      %p40 = scmp.eq.s32.totalorder %s26, 0
      %p41 = por %p39, %p40
      %p42 = scmp.ne.s32.totalorder %s34, %s36
      %p43 = scmp.eq.s32.totalorder %s31, 1
      %p44 = por %p42, %p43
      %p45 = scmp.ne.s32.totalorder %s36, %s37
      %p46 = scmp.eq.s32.totalorder %s31, 0
      %p47 = por %p45, %p46
      %p48 = scmp.ne.s32.totalorder %s36, %s37
      %p49 = scmp.eq.s32.totalorder %s32, 1
      %p50 = por %p48, %p49
      %p52 = scmp.ne.s32.totalorder %s37, %s51
      %p53 = scmp.eq.s32.totalorder %s32, 0
      %p54 = por %p52, %p53
      %s56 = sadd.s32 %s55, 1
      %p59 = scmp.eq.s32.totalorder %s26, 1
      %p60 = scmp.ne.s32.totalorder %s55, %s57
      %p61 = scmp.eq.s32.totalorder %s26, 0
      %p62 = por %p60, %p61
      %p63 = scmp.ne.s32.totalorder %s55, %s57
      %p64 = scmp.eq.s32.totalorder %s31, 1
      %p65 = por %p63, %p64
      %p66 = scmp.ne.s32.totalorder %s57, %s58
      %p67 = scmp.eq.s32.totalorder %s31, 0
      %p68 = por %p66, %p67
      %p69 = scmp.ne.s32.totalorder %s57, %s58
      %p70 = scmp.eq.s32.totalorder %s32, 1
      %p71 = por %p69, %p70
      %p73 = scmp.ne.s32.totalorder %s58, %s72
      %p74 = scmp.eq.s32.totalorder %s32, 0
      %p75 = por %p73, %p74
      %s77 = sadd.s32 %s76, 1
      %p80 = scmp.eq.s32.totalorder %s26, 1
      %p81 = scmp.ne.s32.totalorder %s76, %s78
      %p82 = scmp.eq.s32.totalorder %s26, 0
      %p83 = por %p81, %p82
      %p84 = scmp.ne.s32.totalorder %s76, %s78
      %p85 = scmp.eq.s32.totalorder %s31, 1
      %p86 = por %p84, %p85
      %p87 = scmp.ne.s32.totalorder %s78, %s79
      %p88 = scmp.eq.s32.totalorder %s31, 0
      %p89 = por %p87, %p88
      %p90 = scmp.ne.s32.totalorder %s78, %s79
      %p91 = scmp.eq.s32.totalorder %s32, 1
      %p92 = por %p90, %p91
      %p94 = scmp.ne.s32.totalorder %s79, %s93
      %p95 = scmp.eq.s32.totalorder %s32, 0
      %p96 = por %p94, %p95
      %s98 = sadd.s32 %s97, 1
      %p101 = scmp.eq.s32.totalorder %s26, 1
      %p102 = scmp.ne.s32.totalorder %s97, %s99
      %p103 = scmp.eq.s32.totalorder %s26, 0
      %p104 = por %p102, %p103
      %p105 = scmp.ne.s32.totalorder %s97, %s99
      %p106 = scmp.eq.s32.totalorder %s31, 1
      %p107 = por %p105, %p106
      %p108 = scmp.ne.s32.totalorder %s99, %s100
      %p109 = scmp.eq.s32.totalorder %s31, 0
      %p110 = por %p108, %p109
      %p111 = scmp.ne.s32.totalorder %s99, %s100
      %p112 = scmp.eq.s32.totalorder %s32, 1
      %p113 = por %p111, %p112
      %p115 = scmp.ne.s32.totalorder %s100, %s114
      %p116 = scmp.eq.s32.totalorder %s32, 0
      %p117 = por %p115, %p116
      %s119 = sadd.s32 %s118, 1
      %p122 = scmp.eq.s32.totalorder %s26, 1
      %p123 = scmp.ne.s32.totalorder %s118, %s120
      %p124 = scmp.eq.s32.totalorder %s26, 0
      %p125 = por %p123, %p124
      %p126 = scmp.ne.s32.totalorder %s118, %s120
      %p127 = scmp.eq.s32.totalorder %s31, 1
      %p128 = por %p126, %p127
      %p129 = scmp.ne.s32.totalorder %s120, %s121
      %p130 = scmp.eq.s32.totalorder %s31, 0
      %p131 = por %p129, %p130
      %p132 = scmp.ne.s32.totalorder %s120, %s121
      %p133 = scmp.eq.s32.totalorder %s32, 1
      %p134 = por %p132, %p133
      %p136 = scmp.ne.s32.totalorder %s121, %s135
      %p137 = scmp.eq.s32.totalorder %s32, 0
      %p138 = por %p136, %p137
      %s139 = ssub.s32 %s26, %s33
      %p140 = scmp.eq.s32.totalorder %s139, 0
      %s142 = sadd.s32 %s141, 1
      %s143 = scalar_select %p140, %s141, %s142
      %p146 = pneg %p140
      %p147 = scmp.eq.s32.totalorder %s26, 1
      %p148 = por %p146, %p147
      %p149 = scmp.ne.s32.totalorder %s141, %s144
      %p150 = scmp.eq.s32.totalorder %s26, 0
      %p151 = por %p149, %p150
      %p152 = scmp.ne.s32.totalorder %s141, %s144
      %p153 = scmp.eq.s32.totalorder %s31, 1
      %p154 = por %p152, %p153
      %p155 = scmp.ne.s32.totalorder %s144, %s145
      %p156 = scmp.eq.s32.totalorder %s31, 0
      %p157 = por %p155, %p156
      %p158 = scmp.ne.s32.totalorder %s144, %s145
      %p159 = scmp.eq.s32.totalorder %s32, 1
      %p160 = por %p158, %p159
      %p162 = scmp.ne.s32.totalorder %s145, %s161
      %p163 = scmp.eq.s32.totalorder %s32, 0
      %p164 = por %p162, %p163
      %s165 = ssub.s32 %s26, %s33
      %p166 = scmp.eq.s32.totalorder %s165, 0
      %s168 = sadd.s32 %s167, 1
      %s169 = scalar_select %p166, %s167, %s168
      %p172 = pneg %p166
      %p173 = scmp.eq.s32.totalorder %s26, 1
      %p174 = por %p172, %p173
      %p175 = scmp.ne.s32.totalorder %s167, %s170
      %p176 = scmp.eq.s32.totalorder %s26, 0
      %p177 = por %p175, %p176
      %p178 = scmp.ne.s32.totalorder %s167, %s170
      %p179 = scmp.eq.s32.totalorder %s31, 1
      %p180 = por %p178, %p179
      %p181 = scmp.ne.s32.totalorder %s170, %s171
      %p182 = scmp.eq.s32.totalorder %s31, 0
      %p183 = por %p181, %p182
      %p184 = scmp.ne.s32.totalorder %s170, %s171
      %p185 = scmp.eq.s32.totalorder %s32, 1
      %p186 = por %p184, %p185
      %p188 = scmp.ne.s32.totalorder %s171, %s187
      %p189 = scmp.eq.s32.totalorder %s32, 0
      %p190 = por %p188, %p189
      %s191 = ssub.s32 %s26, %s33
      %p192 = scmp.eq.s32.totalorder %s191, 0
      %s194 = sadd.s32 %s193, 1
      %s195 = scalar_select %p192, %s193, %s194
      %p198 = pneg %p192
      %p199 = scmp.eq.s32.totalorder %s26, 1
      %p200 = por %p198, %p199
      %p201 = scmp.ne.s32.totalorder %s193, %s196
      %p202 = scmp.eq.s32.totalorder %s26, 0
      %p203 = por %p201, %p202
      %p204 = scmp.ne.s32.totalorder %s193, %s196
      %p205 = scmp.eq.s32.totalorder %s31, 1
      %p206 = por %p204, %p205
      %p207 = scmp.ne.s32.totalorder %s196, %s197
      %p208 = scmp.eq.s32.totalorder %s31, 0
      %p209 = por %p207, %p208
      %p210 = scmp.ne.s32.totalorder %s196, %s197
      %p211 = scmp.eq.s32.totalorder %s32, 1
      %p212 = por %p210, %p211
      %p214 = scmp.ne.s32.totalorder %s197, %s213
      %p215 = scmp.eq.s32.totalorder %s32, 0
      %p216 = por %p214, %p215
      %s217 = ssub.s32 %s26, %s33
      %p218 = scmp.eq.s32.totalorder %s217, 0
      %s220 = sadd.s32 %s219, 1
      %s221 = scalar_select %p218, %s219, %s220
      %p224 = pneg %p218
      %p225 = scmp.eq.s32.totalorder %s26, 1
      %p226 = por %p224, %p225
      %p227 = scmp.ne.s32.totalorder %s219, %s222
      %p228 = scmp.eq.s32.totalorder %s26, 0
      %p229 = por %p227, %p228
      %p230 = scmp.ne.s32.totalorder %s219, %s222
      %p231 = scmp.eq.s32.totalorder %s31, 1
      %p232 = por %p230, %p231
      %p233 = scmp.ne.s32.totalorder %s222, %s223
      %p234 = scmp.eq.s32.totalorder %s31, 0
      %p235 = por %p233, %p234
      %p236 = scmp.ne.s32.totalorder %s222, %s223
      %p237 = scmp.eq.s32.totalorder %s32, 1
      %p238 = por %p236, %p237
      %p240 = scmp.ne.s32.totalorder %s223, %s239
      %p241 = scmp.eq.s32.totalorder %s32, 0
      %p242 = por %p240, %p241
      %s243 = ssub.s32 %s26, %s33
      %p244 = scmp.eq.s32.totalorder %s243, 0
      %s246 = sadd.s32 %s245, 1
      %s247 = scalar_select %p244, %s245, %s246
      %p250 = pneg %p244
      %p251 = scmp.eq.s32.totalorder %s26, 1
      %p252 = por %p250, %p251
      %p253 = scmp.ne.s32.totalorder %s245, %s248
      %p254 = scmp.eq.s32.totalorder %s26, 0
      %p255 = por %p253, %p254
      %p256 = scmp.ne.s32.totalorder %s245, %s248
      %p257 = scmp.eq.s32.totalorder %s31, 1
      %p258 = por %p256, %p257
      %p259 = scmp.ne.s32.totalorder %s248, %s249
      %p260 = scmp.eq.s32.totalorder %s31, 0
      %p261 = por %p259, %p260
      %p262 = scmp.ne.s32.totalorder %s248, %s249
      %p263 = scmp.eq.s32.totalorder %s32, 1
      %p264 = por %p262, %p263
      %p266 = scmp.ne.s32.totalorder %s249, %s265
      %p267 = scmp.eq.s32.totalorder %s32, 0
      %p268 = por %p266, %p267
      %s269 = ssub.s32 %s26, %s33
      %p270 = scmp.eq.s32.totalorder %s269, 0
      %s272 = sadd.s32 %s271, 1
      %s273 = scalar_select %p270, %s271, %s272
      %p276 = pneg %p270
      %p277 = scmp.eq.s32.totalorder %s26, 1
      %p278 = por %p276, %p277
      %p279 = scmp.ne.s32.totalorder %s271, %s274
      %p280 = scmp.eq.s32.totalorder %s26, 0
      %p281 = por %p279, %p280
      %p282 = scmp.ne.s32.totalorder %s271, %s274
      %p283 = scmp.eq.s32.totalorder %s31, 1
      %p284 = por %p282, %p283
      %p285 = scmp.ne.s32.totalorder %s274, %s275
      %p286 = scmp.eq.s32.totalorder %s31, 0
      %p287 = por %p285, %p286
      %p288 = scmp.ne.s32.totalorder %s274, %s275
      %p289 = scmp.eq.s32.totalorder %s32, 1
      %p290 = por %p288, %p289
      %p292 = scmp.ne.s32.totalorder %s275, %s291
      %p293 = scmp.eq.s32.totalorder %s32, 0
      %p294 = por %p292, %p293
      %s295 = ssub.s32 %s26, %s33
      %p296 = scmp.eq.s32.totalorder %s295, 0
      %s298 = sadd.s32 %s297, 1
      %s299 = scalar_select %p296, %s297, %s298
      %p302 = pneg %p296
      %p303 = scmp.eq.s32.totalorder %s26, 1
      %p304 = por %p302, %p303
      %p305 = scmp.ne.s32.totalorder %s297, %s300
      %p306 = scmp.eq.s32.totalorder %s26, 0
      %p307 = por %p305, %p306
      %p308 = scmp.ne.s32.totalorder %s297, %s300
      %p309 = scmp.eq.s32.totalorder %s31, 1
      %p310 = por %p308, %p309
      %p311 = scmp.ne.s32.totalorder %s300, %s301
      %p312 = scmp.eq.s32.totalorder %s31, 0
      %p313 = por %p311, %p312
      %p314 = scmp.ne.s32.totalorder %s300, %s301
      %p315 = scmp.eq.s32.totalorder %s32, 1
      %p316 = por %p314, %p315
      %p318 = scmp.ne.s32.totalorder %s301, %s317
      %p319 = scmp.eq.s32.totalorder %s32, 0
      %p320 = por %p318, %p319
      %s321 = ssub.s32 %s26, %s33
      %p322 = scmp.eq.s32.totalorder %s321, 0
      %s324 = sadd.s32 %s323, 1
      %s325 = scalar_select %p322, %s323, %s324
      %p328 = pneg %p322
      %p329 = scmp.eq.s32.totalorder %s26, 1
      %p330 = por %p328, %p329
      %p331 = scmp.ne.s32.totalorder %s323, %s326
      %p332 = scmp.eq.s32.totalorder %s26, 0
      %p333 = por %p331, %p332
      %p334 = scmp.ne.s32.totalorder %s323, %s326
      %p335 = scmp.eq.s32.totalorder %s31, 1
      %p336 = por %p334, %p335
      %p337 = scmp.ne.s32.totalorder %s326, %s327
      %p338 = scmp.eq.s32.totalorder %s31, 0
      %p339 = por %p337, %p338
      %p340 = scmp.ne.s32.totalorder %s326, %s327
      %p341 = scmp.eq.s32.totalorder %s32, 1
      %p342 = por %p340, %p341
      %p344 = scmp.ne.s32.totalorder %s327, %s343
      %p345 = scmp.eq.s32.totalorder %s32, 0
      %p346 = por %p344, %p345
      %s347 = ssub.s32 %s26, %s33
      %p348 = scmp.eq.s32.totalorder %s347, 0
      %s350 = sadd.s32 %s349, 1
      %s351 = scalar_select %p348, %s349, %s350
      %p354 = pneg %p348
      %p355 = scmp.eq.s32.totalorder %s26, 1
      %p356 = por %p354, %p355
      %p357 = scmp.ne.s32.totalorder %s349, %s352
      %p358 = scmp.eq.s32.totalorder %s26, 0
      %p359 = por %p357, %p358
      %p360 = scmp.ne.s32.totalorder %s349, %s352
      %p361 = scmp.eq.s32.totalorder %s31, 1
      %p362 = por %p360, %p361
      %p363 = scmp.ne.s32.totalorder %s352, %s353
      %p364 = scmp.eq.s32.totalorder %s31, 0
      %p365 = por %p363, %p364
      %p366 = scmp.ne.s32.totalorder %s352, %s353
      %p367 = scmp.eq.s32.totalorder %s32, 1
      %p368 = por %p366, %p367
      %p370 = scmp.ne.s32.totalorder %s353, %s369
      %p371 = scmp.eq.s32.totalorder %s32, 0
      %p372 = por %p370, %p371
      %s373 = ssub.s32 %s26, %s33
      %p374 = scmp.eq.s32.totalorder %s373, 0
      %s376 = sadd.s32 %s375, 1
      %s377 = scalar_select %p374, %s375, %s376
      %p380 = pneg %p374
      %p381 = scmp.eq.s32.totalorder %s26, 1
      %p382 = por %p380, %p381
      %p383 = scmp.ne.s32.totalorder %s375, %s378
      %p384 = scmp.eq.s32.totalorder %s26, 0
      %p385 = por %p383, %p384
      %p386 = scmp.ne.s32.totalorder %s375, %s378
      %p387 = scmp.eq.s32.totalorder %s31, 1
      %p388 = por %p386, %p387
      %p389 = scmp.ne.s32.totalorder %s378, %s379
      %p390 = scmp.eq.s32.totalorder %s31, 0
      %p391 = por %p389, %p390
      %p392 = scmp.ne.s32.totalorder %s378, %s379
      %p393 = scmp.eq.s32.totalorder %s32, 1
      %p394 = por %p392, %p393
      %p396 = scmp.ne.s32.totalorder %s379, %s395
      %p397 = scmp.eq.s32.totalorder %s32, 0
      %p398 = por %p396, %p397
      %s399 = ssub.s32 %s26, %s33
      %p400 = scmp.eq.s32.totalorder %s399, 0
      %s402 = sadd.s32 %s401, 1
      %s403 = scalar_select %p400, %s401, %s402
      %p406 = pneg %p400
      %p407 = scmp.eq.s32.totalorder %s26, 1
      %p408 = por %p406, %p407
      %p409 = scmp.ne.s32.totalorder %s401, %s404
      %p410 = scmp.eq.s32.totalorder %s26, 0
      %p411 = por %p409, %p410
      %p412 = scmp.ne.s32.totalorder %s401, %s404
      %p413 = scmp.eq.s32.totalorder %s31, 1
      %p414 = por %p412, %p413
      %p415 = scmp.ne.s32.totalorder %s404, %s405
      %p416 = scmp.eq.s32.totalorder %s31, 0
      %p417 = por %p415, %p416
      %p418 = scmp.ne.s32.totalorder %s404, %s405
      %p419 = scmp.eq.s32.totalorder %s32, 1
      %p420 = por %p418, %p419
      %p422 = scmp.ne.s32.totalorder %s405, %s421
      %p423 = scmp.eq.s32.totalorder %s32, 0
      %p424 = por %p422, %p423
      %s425 = ssub.s32 %s26, %s33
      %p426 = scmp.eq.s32.totalorder %s425, 0
      %s428 = sadd.s32 %s427, 1
      %s429 = scalar_select %p426, %s427, %s428
      %p432 = pneg %p426
      %p433 = scmp.eq.s32.totalorder %s26, 1
      %p434 = por %p432, %p433
      %p435 = scmp.ne.s32.totalorder %s427, %s430
      %p436 = scmp.eq.s32.totalorder %s26, 0
      %p437 = por %p435, %p436
      %p438 = scmp.ne.s32.totalorder %s427, %s430
      %p439 = scmp.eq.s32.totalorder %s31, 1
      %p440 = por %p438, %p439
      %p441 = scmp.ne.s32.totalorder %s430, %s431
      %p442 = scmp.eq.s32.totalorder %s31, 0
      %p443 = por %p441, %p442
      %p444 = scmp.ne.s32.totalorder %s430, %s431
      %p445 = scmp.eq.s32.totalorder %s32, 1
      %p446 = por %p444, %p445
      %p448 = scmp.ne.s32.totalorder %s431, %s447
      %p449 = scmp.eq.s32.totalorder %s32, 0
      %p450 = por %p448, %p449
      %s452 = sadd.s32 %s451, 1
      %p455 = scmp.eq.s32.totalorder %s26, 1
      %p456 = scmp.ne.s32.totalorder %s451, %s453
      %p457 = scmp.eq.s32.totalorder %s26, 0
      %p458 = por %p456, %p457
      %p459 = scmp.ne.s32.totalorder %s451, %s453
      %p460 = scmp.eq.s32.totalorder %s31, 1
      %p461 = por %p459, %p460
      %p462 = scmp.ne.s32.totalorder %s453, %s454
      %p463 = scmp.eq.s32.totalorder %s31, 0
      %p464 = por %p462, %p463
      %p465 = scmp.ne.s32.totalorder %s453, %s454
      %p466 = scmp.eq.s32.totalorder %s32, 1
      %p467 = por %p465, %p466
      %p469 = scmp.ne.s32.totalorder %s454, %s468
      %p470 = scmp.eq.s32.totalorder %s32, 0
      %p471 = por %p469, %p470
      %s473 = sadd.s32 %s472, 1
      %p476 = scmp.eq.s32.totalorder %s26, 1
      %p477 = scmp.ne.s32.totalorder %s472, %s474
      %p478 = scmp.eq.s32.totalorder %s26, 0
      %p479 = por %p477, %p478
      %p480 = scmp.ne.s32.totalorder %s472, %s474
      %p481 = scmp.eq.s32.totalorder %s31, 1
      %p482 = por %p480, %p481
      %p483 = scmp.ne.s32.totalorder %s474, %s475
      %p484 = scmp.eq.s32.totalorder %s31, 0
      %p485 = por %p483, %p484
      %p486 = scmp.ne.s32.totalorder %s474, %s475
      %p487 = scmp.eq.s32.totalorder %s32, 1
      %p488 = por %p486, %p487
      %p490 = scmp.ne.s32.totalorder %s475, %s489
      %p491 = scmp.eq.s32.totalorder %s32, 0
      %p492 = por %p490, %p491
      %s494 = sadd.s32 %s493, 1
      %p497 = scmp.eq.s32.totalorder %s26, 1
      %p498 = scmp.ne.s32.totalorder %s493, %s495
      %p499 = scmp.eq.s32.totalorder %s26, 0
      %p500 = por %p498, %p499
      %p501 = scmp.ne.s32.totalorder %s493, %s495
      %p502 = scmp.eq.s32.totalorder %s31, 1
      %p503 = por %p501, %p502
      %p504 = scmp.ne.s32.totalorder %s495, %s496
      %p505 = scmp.eq.s32.totalorder %s31, 0
      %p506 = por %p504, %p505
      %p507 = scmp.ne.s32.totalorder %s495, %s496
      %p508 = scmp.eq.s32.totalorder %s32, 1
      %p509 = por %p507, %p508
      %p511 = scmp.ne.s32.totalorder %s496, %s510
      %p512 = scmp.eq.s32.totalorder %s32, 0
      %p513 = por %p511, %p512
      %p514 = scmp.le.s32.totalorder 1, %s26
      %p515 = scmp.lt.s32.totalorder %s26, 3
      %p516 = pnand %p514, %p515
      %p517 = pneg %p516
      // Predicated region
      $region9: #{basic_bert_unit_forward.1} parent=5 // pred_check
        _
      $region10: #{basic_bert_unit_forward.1} parent=5 // pred_check_branch
        %519 = sbr.rel (%p516) target = $region12
      $region11: #{basic_bert_unit_forward.1} parent=5 // pred_region
        %s520 = ssub.s32 %s26, 1
        // Predicated region
        $region13: #{basic_bert_unit_forward.1} parent=11 // pred_check
          %p521 = pneg %p47
        $region14: #{basic_bert_unit_forward.1} parent=11 // pred_check_branch
          %523 = sbr.rel (%p521) target = $region16
        $region15: #{basic_bert_unit_forward.1} parent=11 // pred_region
          _
        $region16: #{basic_bert_unit_forward.1} parent=11 // pred_fallthru
          _
        // Predicated region
        $region17: #{basic_bert_unit_forward.1} parent=11 // pred_check
          %p524 = pneg %p68
        $region18: #{basic_bert_unit_forward.1} parent=11 // pred_check_branch
          %526 = sbr.rel (%p524) target = $region20
        $region19: #{basic_bert_unit_forward.1} parent=11 // pred_region
          _
        $region20: #{basic_bert_unit_forward.1} parent=11 // pred_fallthru
          _
        // Predicated region
        $region21: #{basic_bert_unit_forward.1} parent=11 // pred_check
          %p527 = pneg %p89
        $region22: #{basic_bert_unit_forward.1} parent=11 // pred_check_branch
          %529 = sbr.rel (%p527) target = $region24
        $region23: #{basic_bert_unit_forward.1} parent=11 // pred_region
          _
        $region24: #{basic_bert_unit_forward.1} parent=11 // pred_fallthru
          _
        // Predicated region
        $region25: #{basic_bert_unit_forward.1} parent=11 // pred_check
          %p530 = pneg %p110
        $region26: #{basic_bert_unit_forward.1} parent=11 // pred_check_branch
          %532 = sbr.rel (%p530) target = $region28
        $region27: #{basic_bert_unit_forward.1} parent=11 // pred_region
          _
        $region28: #{basic_bert_unit_forward.1} parent=11 // pred_fallthru
          _
        // Predicated region
        $region29: #{basic_bert_unit_forward.1} parent=11 // pred_check
          %p533 = pneg %p131
        $region30: #{basic_bert_unit_forward.1} parent=11 // pred_check_branch
          %535 = sbr.rel (%p533) target = $region32
        $region31: #{basic_bert_unit_forward.1} parent=11 // pred_region
          _
        $region32: #{basic_bert_unit_forward.1} parent=11 // pred_fallthru
          _
        // Predicated region
        $region33: #{basic_bert_unit_forward.1} parent=11 // pred_check
          %p536 = pneg %p464
        $region34: #{basic_bert_unit_forward.1} parent=11 // pred_check_branch
          %538 = sbr.rel (%p536) target = $region36
        $region35: #{basic_bert_unit_forward.1} parent=11 // pred_region
          _
        $region36: #{basic_bert_unit_forward.1} parent=11 // pred_fallthru
          _
        // Predicated region
        $region37: #{basic_bert_unit_forward.1} parent=11 // pred_check
          %p539 = pneg %p485
        $region38: #{basic_bert_unit_forward.1} parent=11 // pred_check_branch
          %541 = sbr.rel (%p539) target = $region40
        $region39: #{basic_bert_unit_forward.1} parent=11 // pred_region
          _
        $region40: #{basic_bert_unit_forward.1} parent=11 // pred_fallthru
          _
      $region12: #{basic_bert_unit_forward.1} parent=5 // pred_fallthru
        _
      %p542 = scmp.lt.s32.totalorder %s26, 2
      // Predicated region
      $region41: #{basic_bert_unit_forward.1} parent=5 // pred_check
        %p543 = pneg %p542
      $region42: #{basic_bert_unit_forward.1} parent=5 // pred_check_branch
        %545 = sbr.rel (%p543) target = $region44
      $region43: #{basic_bert_unit_forward.1} parent=5 // pred_region
        // Predicated region
        $region45: #{basic_bert_unit_forward.1} parent=43 // pred_check
          %p546 = pneg %p151
        $region46: #{basic_bert_unit_forward.1} parent=43 // pred_check_branch
          %548 = sbr.rel (%p546) target = $region48
        $region47: #{basic_bert_unit_forward.1} parent=43 // pred_region
          %p549 = scmp.lt.s32.totalorder %s26, 1
          %s550 = scalar_select %p549, %s26, 1
          %s551 = smul.addr %s550, 4
          %s552 = smul.addr %s551, 4
          %s553 = scalar_lea.vmem %s5, %s552
        $region48: #{basic_bert_unit_forward.1} parent=43 // pred_fallthru
          _
        // Predicated region
        $region49: #{basic_bert_unit_forward.1} parent=43 // pred_check
          %p554 = pneg %p177
        $region50: #{basic_bert_unit_forward.1} parent=43 // pred_check_branch
          %556 = sbr.rel (%p554) target = $region52
        $region51: #{basic_bert_unit_forward.1} parent=43 // pred_region
          %p557 = scmp.lt.s32.totalorder %s26, 1
          %s558 = scalar_select %p557, %s26, 1
          %s559 = scalar_lea.vmem %s6, %s558
        $region52: #{basic_bert_unit_forward.1} parent=43 // pred_fallthru
          _
        // Predicated region
        $region53: #{basic_bert_unit_forward.1} parent=43 // pred_check
          %p560 = pneg %p203
        $region54: #{basic_bert_unit_forward.1} parent=43 // pred_check_branch
          %562 = sbr.rel (%p560) target = $region56
        $region55: #{basic_bert_unit_forward.1} parent=43 // pred_region
          %p563 = scmp.lt.s32.totalorder %s26, 1
          %s564 = scalar_select %p563, %s26, 1
          %s565 = smul.addr %s564, 4
          %s566 = smul.addr %s565, 4
          %s567 = scalar_lea.vmem %s7, %s566
        $region56: #{basic_bert_unit_forward.1} parent=43 // pred_fallthru
          _
        // Predicated region
        $region57: #{basic_bert_unit_forward.1} parent=43 // pred_check
          %p568 = pneg %p229
        $region58: #{basic_bert_unit_forward.1} parent=43 // pred_check_branch
          %570 = sbr.rel (%p568) target = $region60
        $region59: #{basic_bert_unit_forward.1} parent=43 // pred_region
          %p571 = scmp.lt.s32.totalorder %s26, 1
          %s572 = scalar_select %p571, %s26, 1
          %s573 = scalar_lea.vmem %s8, %s572
        $region60: #{basic_bert_unit_forward.1} parent=43 // pred_fallthru
          _
        // Predicated region
        $region61: #{basic_bert_unit_forward.1} parent=43 // pred_check
          %p574 = pneg %p255
        $region62: #{basic_bert_unit_forward.1} parent=43 // pred_check_branch
          %576 = sbr.rel (%p574) target = $region64
        $region63: #{basic_bert_unit_forward.1} parent=43 // pred_region
          %p577 = scmp.lt.s32.totalorder %s26, 1
          %s578 = scalar_select %p577, %s26, 1
          %s579 = scalar_lea.vmem %s9, %s578
        $region64: #{basic_bert_unit_forward.1} parent=43 // pred_fallthru
          _
        // Predicated region
        $region65: #{basic_bert_unit_forward.1} parent=43 // pred_check
          %p580 = pneg %p281
        $region66: #{basic_bert_unit_forward.1} parent=43 // pred_check_branch
          %582 = sbr.rel (%p580) target = $region68
        $region67: #{basic_bert_unit_forward.1} parent=43 // pred_region
          %p583 = scmp.lt.s32.totalorder %s26, 1
          %s584 = scalar_select %p583, %s26, 1
          %s585 = scalar_lea.vmem %s10, %s584
        $region68: #{basic_bert_unit_forward.1} parent=43 // pred_fallthru
          _
        // Predicated region
        $region69: #{basic_bert_unit_forward.1} parent=43 // pred_check
          %p586 = pneg %p307
        $region70: #{basic_bert_unit_forward.1} parent=43 // pred_check_branch
          %588 = sbr.rel (%p586) target = $region72
        $region71: #{basic_bert_unit_forward.1} parent=43 // pred_region
          %p589 = scmp.lt.s32.totalorder %s26, 1
          %s590 = scalar_select %p589, %s26, 1
          %s591 = smul.addr %s590, 4
          %s592 = smul.addr %s591, 4
          %s593 = scalar_lea.vmem %s11, %s592
        $region72: #{basic_bert_unit_forward.1} parent=43 // pred_fallthru
          _
        // Predicated region
        $region73: #{basic_bert_unit_forward.1} parent=43 // pred_check
          %p594 = pneg %p333
        $region74: #{basic_bert_unit_forward.1} parent=43 // pred_check_branch
          %596 = sbr.rel (%p594) target = $region76
        $region75: #{basic_bert_unit_forward.1} parent=43 // pred_region
          %p597 = scmp.lt.s32.totalorder %s26, 1
          %s598 = scalar_select %p597, %s26, 1
          %s599 = scalar_lea.vmem %s12, %s598
        $region76: #{basic_bert_unit_forward.1} parent=43 // pred_fallthru
          _
        // Predicated region
        $region77: #{basic_bert_unit_forward.1} parent=43 // pred_check
          %p600 = pneg %p359
        $region78: #{basic_bert_unit_forward.1} parent=43 // pred_check_branch
          %602 = sbr.rel (%p600) target = $region80
        $region79: #{basic_bert_unit_forward.1} parent=43 // pred_region
          %p603 = scmp.lt.s32.totalorder %s26, 1
          %s604 = scalar_select %p603, %s26, 1
          %s605 = smul.addr %s604, 8
          %s606 = smul.addr %s605, 4
          %s607 = scalar_lea.vmem %s13, %s606
        $region80: #{basic_bert_unit_forward.1} parent=43 // pred_fallthru
          _
        // Predicated region
        $region81: #{basic_bert_unit_forward.1} parent=43 // pred_check
          %p608 = pneg %p385
        $region82: #{basic_bert_unit_forward.1} parent=43 // pred_check_branch
          %610 = sbr.rel (%p608) target = $region84
        $region83: #{basic_bert_unit_forward.1} parent=43 // pred_region
          %p611 = scmp.lt.s32.totalorder %s26, 1
          %s612 = scalar_select %p611, %s26, 1
          %s613 = scalar_lea.vmem %s14, %s612
        $region84: #{basic_bert_unit_forward.1} parent=43 // pred_fallthru
          _
        // Predicated region
        $region85: #{basic_bert_unit_forward.1} parent=43 // pred_check
          %p614 = pneg %p411
        $region86: #{basic_bert_unit_forward.1} parent=43 // pred_check_branch
          %616 = sbr.rel (%p614) target = $region88
        $region87: #{basic_bert_unit_forward.1} parent=43 // pred_region
          %p617 = scmp.lt.s32.totalorder %s26, 1
          %s618 = scalar_select %p617, %s26, 1
          %s619 = scalar_lea.vmem %s15, %s618
        $region88: #{basic_bert_unit_forward.1} parent=43 // pred_fallthru
          _
        // Predicated region
        $region89: #{basic_bert_unit_forward.1} parent=43 // pred_check
          %p620 = pneg %p437
        $region90: #{basic_bert_unit_forward.1} parent=43 // pred_check_branch
          %622 = sbr.rel (%p620) target = $region92
        $region91: #{basic_bert_unit_forward.1} parent=43 // pred_region
          %p623 = scmp.lt.s32.totalorder %s26, 1
          %s624 = scalar_select %p623, %s26, 1
          %s625 = scalar_lea.vmem %s16, %s624
        $region92: #{basic_bert_unit_forward.1} parent=43 // pred_fallthru
          _
      $region44: #{basic_bert_unit_forward.1} parent=5 // pred_fallthru
        _
      %p626 = scmp.le.s32.totalorder 1, %s26
      %p627 = scmp.lt.s32.totalorder %s26, 3
      %p628 = pnand %p626, %p627
      %p629 = pneg %p628
      // Predicated region
      $region93: #{basic_bert_unit_forward.1} parent=5 // pred_check
        _
      $region94: #{basic_bert_unit_forward.1} parent=5 // pred_check_branch
        %631 = sbr.rel (%p628) target = $region96
      $region95: #{basic_bert_unit_forward.1} parent=5 // pred_region
        %s632 = ssub.s32 %s26, 1
        %p633 = pneg %p47
        %p634 = pneg %p44
        %p635 = pneg %p68
        %p636 = pneg %p65
        %p637 = pneg %p89
        %p638 = pneg %p86
        %p639 = pneg %p110
        %p640 = pneg %p107
        %p641 = pneg %p131
        %p642 = pneg %p128
        %p643 = scmp.lt.s32.totalorder %s31, 1
        %s644 = scalar_select %p643, %s31, 1
        %s645 = smul.addr %s644, 4
        %s646 = smul.addr %s645, 4
        %s647 = scalar_lea.vmem %s5, %s646
        %p648 = pneg %p157
        %p649 = pneg %p154
        %p650 = scmp.lt.s32.totalorder %s31, 1
        %s651 = scalar_select %p650, %s31, 1
        %s652 = scalar_lea.vmem %s6, %s651
        %p653 = pneg %p183
        %p654 = pneg %p180
        %p655 = scmp.lt.s32.totalorder %s31, 1
        %s656 = scalar_select %p655, %s31, 1
        %s657 = smul.addr %s656, 4
        %s658 = smul.addr %s657, 4
        %s659 = scalar_lea.vmem %s7, %s658
        %p660 = pneg %p209
        %p661 = pneg %p206
        %p662 = scmp.lt.s32.totalorder %s31, 1
        %s663 = scalar_select %p662, %s31, 1
        %s664 = scalar_lea.vmem %s8, %s663
        %p665 = pneg %p235
        %p666 = pneg %p232
        %p667 = scmp.lt.s32.totalorder %s31, 1
        %s668 = scalar_select %p667, %s31, 1
        %s669 = scalar_lea.vmem %s9, %s668
        %p670 = pneg %p261
        %p671 = pneg %p258
        %p672 = scmp.lt.s32.totalorder %s31, 1
        %s673 = scalar_select %p672, %s31, 1
        %s674 = scalar_lea.vmem %s10, %s673
        %p675 = pneg %p287
        %p676 = pneg %p284
        %p677 = scmp.lt.s32.totalorder %s31, 1
        %s678 = scalar_select %p677, %s31, 1
        %s679 = smul.addr %s678, 4
        %s680 = smul.addr %s679, 4
        %s681 = scalar_lea.vmem %s11, %s680
        %p682 = pneg %p313
        %p683 = pneg %p310
        %p684 = scmp.lt.s32.totalorder %s31, 1
        %s685 = scalar_select %p684, %s31, 1
        %s686 = scalar_lea.vmem %s12, %s685
        %p687 = pneg %p339
        %p688 = pneg %p336
        %p689 = scmp.lt.s32.totalorder %s31, 1
        %s690 = scalar_select %p689, %s31, 1
        %s691 = smul.addr %s690, 8
        %s692 = smul.addr %s691, 4
        %s693 = scalar_lea.vmem %s13, %s692
        %p694 = pneg %p365
        %p695 = pneg %p362
        %p696 = scmp.lt.s32.totalorder %s31, 1
        %s697 = scalar_select %p696, %s31, 1
        %s698 = scalar_lea.vmem %s14, %s697
        %p699 = pneg %p391
        %p700 = pneg %p388
        %p701 = scmp.lt.s32.totalorder %s31, 1
        %s702 = scalar_select %p701, %s31, 1
        %s703 = scalar_lea.vmem %s15, %s702
        %p704 = pneg %p417
        %p705 = pneg %p414
        %p706 = scmp.lt.s32.totalorder %s31, 1
        %s707 = scalar_select %p706, %s31, 1
        %s708 = scalar_lea.vmem %s16, %s707
        %p709 = pneg %p443
        %p710 = pneg %p440
        %p711 = pneg %p464
        %p712 = pneg %p461
        %p713 = pneg %p485
        %p714 = pneg %p482
        %p715 = pneg %p506
        %p716 = pneg %p503
        %p717 = scmp.lt.s32.totalorder %s31, 1
        %s718 = scalar_select %p717, %s31, 1
        %s719 = smul.addr %s718, 4
        %s720 = smul.addr %s719, 4
        %s721 = scalar_lea.vmem %s5, %s720
        %p722 = scmp.lt.s32.totalorder %s31, 1
        %s723 = scalar_select %p722, %s31, 1
        %s724 = scalar_lea.vmem %s6, %s723
        %p725 = scmp.lt.s32.totalorder %s31, 1
        %s726 = scalar_select %p725, %s31, 1
        %s727 = smul.addr %s726, 4
        %s728 = smul.addr %s727, 4
        %s729 = scalar_lea.vmem %s7, %s728
        %p730 = scmp.lt.s32.totalorder %s31, 1
        %s731 = scalar_select %p730, %s31, 1
        %s732 = scalar_lea.vmem %s8, %s731
        %p733 = scmp.lt.s32.totalorder %s31, 1
        %s734 = scalar_select %p733, %s31, 1
        %s735 = scalar_lea.vmem %s9, %s734
        %p736 = scmp.lt.s32.totalorder %s31, 1
        %s737 = scalar_select %p736, %s31, 1
        %s738 = scalar_lea.vmem %s10, %s737
        %p739 = scmp.lt.s32.totalorder %s31, 1
        %s740 = scalar_select %p739, %s31, 1
        %s741 = smul.addr %s740, 4
        %s742 = smul.addr %s741, 4
        %s743 = scalar_lea.vmem %s11, %s742
        %p744 = scmp.lt.s32.totalorder %s31, 1
        %s745 = scalar_select %p744, %s31, 1
        %s746 = scalar_lea.vmem %s12, %s745
        %p747 = scmp.lt.s32.totalorder %s31, 1
        %s748 = scalar_select %p747, %s31, 1
        %s749 = smul.addr %s748, 8
        %s750 = smul.addr %s749, 4
        %s751 = scalar_lea.vmem %s13, %s750
        %p752 = scmp.lt.s32.totalorder %s31, 1
        %s753 = scalar_select %p752, %s31, 1
        %s754 = scalar_lea.vmem %s14, %s753
        %p755 = scmp.lt.s32.totalorder %s31, 1
        %s756 = scalar_select %p755, %s31, 1
        %s757 = scalar_lea.vmem %s15, %s756
        %p758 = scmp.lt.s32.totalorder %s31, 1
        %s759 = scalar_select %p758, %s31, 1
        %s760 = scalar_lea.vmem %s16, %s759
        %p762 = scmp.eq.s32.totalorder %s31, 0
        // Predicated region
        $region97: #{basic_bert_unit_forward.1} parent=95 // pred_check
          %p763 = pneg %p762
        $region98: #{basic_bert_unit_forward.1} parent=95 // pred_check_branch
          %765 = sbr.rel (%p763) target = $region100
        $region99: #{basic_bert_unit_forward.1} parent=95 // pred_region
          %v766 = vld [vmem:[%s0] sm:$0xff]
          %v767 = vld [vmem:[%s0 + $0x8] sm:$0xff]
          %v768 = vld [vmem:[%s3] sm:$0x1]
          %v769 = vld [vmem:[%s4] sm:$0x1]
          %vm770 = vcmask 261120
          %v771 = vsel %vm770, %v766, 0.0
          %772 = vadd.xlane.f32.xlu0 %v771
          %v773 = vpop.xlane.xlu0 %772
          %v774 = vsel %vm770, %v767, 0.0
          %775 = vadd.xlane.f32.xlu0 %v774
          %v776 = vpop.xlane.xlu0 %775
          %v777 = vrcp.pop 32.0
          %v778 = vmul.f32 %v773, %v777
          %v779 = vmul.f32 %v776, %v777
          %v780 = vsub.f32 %v766, %v778
          %v781 = vsub.f32 %v767, %v779
          %v782 = vmul.f32 %v780, %v780
          %v783 = vmul.f32 %v781, %v781
          %v784 = vsel %vm770, %v782, 0.0
          %785 = vadd.xlane.f32.xlu0 %v784
          %v786 = vpop.xlane.xlu0 %785
          %v787 = vsel %vm770, %v783, 0.0
          %788 = vadd.xlane.f32.xlu0 %v787
          %v789 = vpop.xlane.xlu0 %788
          %v790 = vmul.f32 %v786, %v777
          %v791 = vmul.f32 %v789, %v777
          %v792 = vadd.f32 %v790, 1e-12
          %v793 = vadd.f32 %v791, 1e-12
          %v794 = vrsqrt.pop %v792
          %v795 = vrsqrt.pop %v793
          %v796 = vmul.f32 %v780, %v794
          %v797 = vmul.f32 %v781, %v795
          %v799 = vlaneseq
          %v800 = vshrl.u32 %v799, 7
          %v801 = vsub.s32 0, %v800
          %v802 = vrot.slane %v768, %v801
          %v804 = vmul.f32 %v796, %v802
          %v805 = vmul.f32 %v797, %v802
          %v807 = vlaneseq
          %v808 = vshrl.u32 %v807, 7
          %v809 = vsub.s32 0, %v808
          %v810 = vrot.slane %v769, %v809
          %v812 = vadd.f32 %v804, %v810
          %v813 = vadd.f32 %v805, %v810
          %814 = vst.msk [vmem:[#allocation2] sm:$0xff] %vm770, %v812
          %815 = vst.msk [vmem:[#allocation2 + $0x8] sm:$0xff] %vm770, %v813
        $region100: #{basic_bert_unit_forward.1} parent=95 // pred_fallthru
          _
        %v816 = vld [vmem:[#allocation2] sm:$0xff]
        %v817 = vld [vmem:[#allocation2 + $0x8] sm:$0xff]
        %v818 = vpack.c.bf16 %v817, %v816
        %v819 = vld [vmem:[%s721] sm:$0xf]
        %v820 = vld [vmem:[%s721 + $0x4] sm:$0xf]
        %v821 = vld [vmem:[%s721 + $0x8] sm:$0xf]
        %v822 = vld [vmem:[%s721 + $0xc] sm:$0xf]
        %v823 = vld [vmem:[%s724] sm:$0x1]
        %v825 = vlaneseq
        %v826 = vshrl.u32 %v825, 7
        %v827 = vsub.s32 0, %v826
        %v828 = vrot.slane %v823, %v827
        %v834 = vunpack.c.l.b16 %v819
        %v835 = vunpack.c.l.b16 %v820
        %v836 = vunpack.c.l.b16 %v821
        %v837 = vunpack.c.l.b16 %v822
        %v838 = vpack.c.b16 %v835, %v834
        %v839 = vpack.c.b16 %v837, %v836
        %vm842 = vcmask 261120
        %v844 = vsel %vm842, %v818, 0
        %846 = vmatprep.subr.bf16.mxu0 0
        %847 = vmatpush1.bf16.msra.mxu0 %v838
        %848 = vmatprep.subr.bf16.mxu0 0
        %849 = vmatpush1.bf16.msra.mxu0 %v839
        %850 = vmatprep.subr.bf16.mxu0 0
        %851 = vmatpush1.bf16.msra.mxu0 0
        %852 = vmatprep.subr.bf16.mxu0 0
        %853 = vmatpush1.bf16.msra.mxu0 0
        %854 = vmatprep.subr.bf16.mxu0 0
        %855 = vmatpush1.bf16.msra.mxu0 0
        %856 = vmatprep.subr.bf16.mxu0 0
        %857 = vmatpush1.bf16.msra.mxu0 0
        %858 = vmatprep.subr.bf16.mxu0 0
        %859 = vmatpush1.bf16.msra.mxu0 0
        %860 = vmatprep.subr.bf16.mxu0 0
        %861 = vmatpush1.bf16.msra.mxu0 0
        %862 = vmatprep.subr.bf16.mxu0 0
        %863 = vmatpush1.bf16.msra.mxu0 0
        %864 = vmatprep.subr.bf16.mxu0 0
        %865 = vmatpush1.bf16.msra.mxu0 0
        %866 = vmatprep.subr.bf16.mxu0 0
        %867 = vmatpush1.bf16.msra.mxu0 0
        %868 = vmatprep.subr.bf16.mxu0 0
        %869 = vmatpush1.bf16.msra.mxu0 0
        %870 = vmatprep.subr.bf16.mxu0 0
        %871 = vmatpush1.bf16.msra.mxu0 0
        %872 = vmatprep.subr.bf16.mxu0 0
        %873 = vmatpush1.bf16.msra.mxu0 0
        %874 = vmatprep.subr.bf16.mxu0 0
        %875 = vmatpush1.bf16.msra.mxu0 0
        %876 = vmatprep.subr.bf16.mxu0 0
        %877 = vmatpush1.bf16.msra.mxu0 0
        %878 = vmatprep.mubr.bf16.mxu0 0
        %879 = vmatmul.mubr.bf16.gmra.mrb[0].mxu0 %v844
        %v880 = vpop.f32.mrb[0].mxu0
        %v881 = vadd.f32 %v828, %v880
        %v882 = vpop.f32.mrb[0].mxu0
        %v883 = vpop.f32.mrb[0].mxu0
        %v884 = vadd.f32 %v828, %v883
        %v885 = vpop.f32.mrb[0].mxu0
        %886 = vdwg.mxu0
        %v887 = vld [vmem:[%s1] sm:$0x1]
        %v888 = vld [vmem:[%s1 + $0x1] sm:$0x1]
        %v889 = vpack.c.bf16 %v881, %v881
        %v890 = vpack.c.bf16 %v884, %v884
        %892 = vrot.lane.b32.xlu0 %v889, 96
        %v893 = vpop.permute.xlu0 %892
        %vm894 = vcmask 64512
        %v896 = vsel %vm894, %v889, 0
        %v899 = vsel %vm894, %v893, 0
        %901 = vmatprep.subr.bf16.mxu0 0
        %902 = vmatpush1.bf16.xpose.msra.mxu0 %v899
        %903 = vmatprep.subr.bf16.mxu0 0
        %904 = vmatpush1.bf16.xpose.msra.mxu0 0
        %905 = vmatprep.subr.bf16.mxu0 0
        %906 = vmatpush1.bf16.xpose.msra.mxu0 0
        %907 = vmatprep.subr.bf16.mxu0 0
        %908 = vmatpush1.bf16.xpose.msra.mxu0 0
        %909 = vmatprep.subr.bf16.mxu0 0
        %910 = vmatpush1.bf16.xpose.msra.mxu0 0
        %911 = vmatprep.subr.bf16.mxu0 0
        %912 = vmatpush1.bf16.xpose.msra.mxu0 0
        %913 = vmatprep.subr.bf16.mxu0 0
        %914 = vmatpush1.bf16.xpose.msra.mxu0 0
        %915 = vmatprep.subr.bf16.mxu0 0
        %916 = vmatpush1.bf16.xpose.msra.mxu0 0
        %917 = vmatprep.subr.bf16.mxu0 0
        %918 = vmatpush1.bf16.xpose.msra.mxu0 0
        %919 = vmatprep.subr.bf16.mxu0 0
        %920 = vmatpush1.bf16.xpose.msra.mxu0 0
        %921 = vmatprep.subr.bf16.mxu0 0
        %922 = vmatpush1.bf16.xpose.msra.mxu0 0
        %923 = vmatprep.subr.bf16.mxu0 0
        %924 = vmatpush1.bf16.xpose.msra.mxu0 0
        %925 = vmatprep.subr.bf16.mxu0 0
        %926 = vmatpush1.bf16.xpose.msra.mxu0 0
        %927 = vmatprep.subr.bf16.mxu0 0
        %928 = vmatpush1.bf16.xpose.msra.mxu0 0
        %929 = vmatprep.subr.bf16.mxu0 0
        %930 = vmatpush1.bf16.xpose.msra.mxu0 0
        %931 = vmatprep.subr.bf16.mxu0 0
        %932 = vmatpush1.bf16.xpose.msra.mxu0 0
        %933 = vmatprep.mubr.bf16.mxu0 0
        %934 = vmatmul.mubr.bf16.gmra.mrb[0].mxu0 %v896
        %v935 = vpop.f32.mrb[0].mxu0
        %v936 = vadd.f32 0.0, %v935
        %v937 = vpop.f32.mrb[0].mxu0
        %v938 = vpop.f32.mrb[0].mxu0
        %v939 = vpop.f32.mrb[0].mxu0
        %940 = vdwg.mxu0
        %942 = vrot.lane.b32.xlu0 %v890, 96
        %v943 = vpop.permute.xlu0 %942
        %v945 = vsel %vm894, %v890, 0
        %v948 = vsel %vm894, %v943, 0
        %950 = vmatprep.subr.bf16.mxu0 0
        %951 = vmatpush1.bf16.xpose.msra.mxu0 %v948
        %952 = vmatprep.subr.bf16.mxu0 0
        %953 = vmatpush1.bf16.xpose.msra.mxu0 0
        %954 = vmatprep.subr.bf16.mxu0 0
        %955 = vmatpush1.bf16.xpose.msra.mxu0 0
        %956 = vmatprep.subr.bf16.mxu0 0
        %957 = vmatpush1.bf16.xpose.msra.mxu0 0
        %958 = vmatprep.subr.bf16.mxu0 0
        %959 = vmatpush1.bf16.xpose.msra.mxu0 0
        %960 = vmatprep.subr.bf16.mxu0 0
        %961 = vmatpush1.bf16.xpose.msra.mxu0 0
        %962 = vmatprep.subr.bf16.mxu0 0
        %963 = vmatpush1.bf16.xpose.msra.mxu0 0
        %964 = vmatprep.subr.bf16.mxu0 0
        %965 = vmatpush1.bf16.xpose.msra.mxu0 0
        %966 = vmatprep.subr.bf16.mxu0 0
        %967 = vmatpush1.bf16.xpose.msra.mxu0 0
        %968 = vmatprep.subr.bf16.mxu0 0
        %969 = vmatpush1.bf16.xpose.msra.mxu0 0
        %970 = vmatprep.subr.bf16.mxu0 0
        %971 = vmatpush1.bf16.xpose.msra.mxu0 0
        %972 = vmatprep.subr.bf16.mxu0 0
        %973 = vmatpush1.bf16.xpose.msra.mxu0 0
        %974 = vmatprep.subr.bf16.mxu0 0
        %975 = vmatpush1.bf16.xpose.msra.mxu0 0
        %976 = vmatprep.subr.bf16.mxu0 0
        %977 = vmatpush1.bf16.xpose.msra.mxu0 0
        %978 = vmatprep.subr.bf16.mxu0 0
        %979 = vmatpush1.bf16.xpose.msra.mxu0 0
        %980 = vmatprep.subr.bf16.mxu0 0
        %981 = vmatpush1.bf16.xpose.msra.mxu0 0
        %982 = vmatprep.mubr.bf16.mxu0 0
        %983 = vmatmul.mubr.bf16.gmra.mrb[0].mxu0 %v945
        %v984 = vpop.f32.mrb[0].mxu0
        %v985 = vadd.f32 0.0, %v984
        %v986 = vpop.f32.mrb[0].mxu0
        %v987 = vpop.f32.mrb[0].mxu0
        %v988 = vpop.f32.mrb[0].mxu0
        %989 = vdwg.mxu0
        %v990 = vmul.f32 %v936, 0.35355338
        %v991 = vmul.f32 %v985, 0.35355338
        %v994 = vlaneseq
        %v995 = vshrl.u32 %v994, 7
        %v996 = vsub.s32 0, %v995
        %v997 = vrot.slane %v887, %v996
        %v998 = vlaneseq
        %v999 = vshrl.u32 %v998, 7
        %v1000 = vsub.s32 0, %v999
        %v1001 = vrot.slane %v888, %v1000
        %v1004 = vadd.f32 %v990, %v997
        %v1005 = vadd.f32 %v991, %v1001
        %v1006 = vsel %vm894, %v1004, -inf
        %1007 = vmax.xlane.f32.xlu0 %v1006
        %v1008 = vpop.xlane.xlu0 %1007
        %v1009 = vsel %vm894, %v1005, -inf
        %1010 = vmax.xlane.f32.xlu0 %v1009
        %v1011 = vpop.xlane.xlu0 %1010
        %v1012 = vsub.f32 %v1004, %v1008
        %v1013 = vsub.f32 %v1005, %v1011
        %v1014 = vmul.f32 %v1012, 1.442695
        %v1015 = vpow.pop %v1014
        %v1016 = vmul.f32 %v1013, 1.442695
        %v1017 = vpow.pop %v1016
        %v1018 = vsel %vm894, %v1015, 0.0
        %1019 = vadd.xlane.f32.xlu0 %v1018
        %v1020 = vpop.xlane.xlu0 %1019
        %v1021 = vsel %vm894, %v1017, 0.0
        %1022 = vadd.xlane.f32.xlu0 %v1021
        %v1023 = vpop.xlane.xlu0 %1022
        %v1024 = vrcp.pop %v1020
        %v1025 = vrcp.pop %v1023
        %v1026 = vmul.f32 %v1015, %v1024
        %v1027 = vmul.f32 %v1017, %v1025
        %v1028 = vpack.c.bf16 %v1026, %v1026
        %v1029 = vpack.c.bf16 %v1027, %v1027
        %1030 = vrot.lane.b32.xlu0 %v889, 64
        %v1031 = vpop.permute.xlu0 %1030
        %v1033 = vsel %vm894, %v1028, 0
        %vm1035 = vcmask 1043456
        %v1037 = vsel %vm1035, %v1031, 0
        %1039 = vmatprep.subr.bf16.mxu0 0
        %1040 = vmatpush1.bf16.msra.mxu0 %v1037
        %1041 = vmatprep.subr.bf16.mxu0 0
        %1042 = vmatpush1.bf16.msra.mxu0 0
        %1043 = vmatprep.subr.bf16.mxu0 0
        %1044 = vmatpush1.bf16.msra.mxu0 0
        %1045 = vmatprep.subr.bf16.mxu0 0
        %1046 = vmatpush1.bf16.msra.mxu0 0
        %1047 = vmatprep.subr.bf16.mxu0 0
        %1048 = vmatpush1.bf16.msra.mxu0 0
        %1049 = vmatprep.subr.bf16.mxu0 0
        %1050 = vmatpush1.bf16.msra.mxu0 0
        %1051 = vmatprep.subr.bf16.mxu0 0
        %1052 = vmatpush1.bf16.msra.mxu0 0
        %1053 = vmatprep.subr.bf16.mxu0 0
        %1054 = vmatpush1.bf16.msra.mxu0 0
        %1055 = vmatprep.subr.bf16.mxu0 0
        %1056 = vmatpush1.bf16.msra.mxu0 0
        %1057 = vmatprep.subr.bf16.mxu0 0
        %1058 = vmatpush1.bf16.msra.mxu0 0
        %1059 = vmatprep.subr.bf16.mxu0 0
        %1060 = vmatpush1.bf16.msra.mxu0 0
        %1061 = vmatprep.subr.bf16.mxu0 0
        %1062 = vmatpush1.bf16.msra.mxu0 0
        %1063 = vmatprep.subr.bf16.mxu0 0
        %1064 = vmatpush1.bf16.msra.mxu0 0
        %1065 = vmatprep.subr.bf16.mxu0 0
        %1066 = vmatpush1.bf16.msra.mxu0 0
        %1067 = vmatprep.subr.bf16.mxu0 0
        %1068 = vmatpush1.bf16.msra.mxu0 0
        %1069 = vmatprep.subr.bf16.mxu0 0
        %1070 = vmatpush1.bf16.msra.mxu0 0
        %1071 = vmatprep.mubr.bf16.mxu0 0
        %1072 = vmatmul.mubr.bf16.gmra.mrb[0].mxu0 %v1033
        %v1073 = vpop.f32.mrb[0].mxu0
        %v1074 = vadd.f32 0.0, %v1073
        %v1075 = vpop.f32.mrb[0].mxu0
        %v1076 = vpop.f32.mrb[0].mxu0
        %v1077 = vpop.f32.mrb[0].mxu0
        %1078 = vdwg.mxu0
        %1079 = vrot.lane.b32.xlu0 %v890, 64
        %v1080 = vpop.permute.xlu0 %1079
        %v1082 = vsel %vm894, %v1029, 0
        %v1085 = vsel %vm1035, %v1080, 0
        %1087 = vmatprep.subr.bf16.mxu0 0
        %1088 = vmatpush1.bf16.msra.mxu0 %v1085
        %1089 = vmatprep.subr.bf16.mxu0 0
        %1090 = vmatpush1.bf16.msra.mxu0 0
        %1091 = vmatprep.subr.bf16.mxu0 0
        %1092 = vmatpush1.bf16.msra.mxu0 0
        %1093 = vmatprep.subr.bf16.mxu0 0
        %1094 = vmatpush1.bf16.msra.mxu0 0
        %1095 = vmatprep.subr.bf16.mxu0 0
        %1096 = vmatpush1.bf16.msra.mxu0 0
        %1097 = vmatprep.subr.bf16.mxu0 0
        %1098 = vmatpush1.bf16.msra.mxu0 0
        %1099 = vmatprep.subr.bf16.mxu0 0
        %1100 = vmatpush1.bf16.msra.mxu0 0
        %1101 = vmatprep.subr.bf16.mxu0 0
        %1102 = vmatpush1.bf16.msra.mxu0 0
        %1103 = vmatprep.subr.bf16.mxu0 0
        %1104 = vmatpush1.bf16.msra.mxu0 0
        %1105 = vmatprep.subr.bf16.mxu0 0
        %1106 = vmatpush1.bf16.msra.mxu0 0
        %1107 = vmatprep.subr.bf16.mxu0 0
        %1108 = vmatpush1.bf16.msra.mxu0 0
        %1109 = vmatprep.subr.bf16.mxu0 0
        %1110 = vmatpush1.bf16.msra.mxu0 0
        %1111 = vmatprep.subr.bf16.mxu0 0
        %1112 = vmatpush1.bf16.msra.mxu0 0
        %1113 = vmatprep.subr.bf16.mxu0 0
        %1114 = vmatpush1.bf16.msra.mxu0 0
        %1115 = vmatprep.subr.bf16.mxu0 0
        %1116 = vmatpush1.bf16.msra.mxu0 0
        %1117 = vmatprep.subr.bf16.mxu0 0
        %1118 = vmatpush1.bf16.msra.mxu0 0
        %1119 = vmatprep.mubr.bf16.mxu0 0
        %1120 = vmatmul.mubr.bf16.gmra.mrb[0].mxu0 %v1082
        %v1121 = vpop.f32.mrb[0].mxu0
        %v1122 = vadd.f32 0.0, %v1121
        %v1123 = vpop.f32.mrb[0].mxu0
        %v1124 = vpop.f32.mrb[0].mxu0
        %v1125 = vpop.f32.mrb[0].mxu0
        %1126 = vdwg.mxu0
        %1127 = vrot.lane.b32.xlu0 %v889, 120
        %v1128 = vpop.permute.xlu0 %1127
        %1129 = vrot.lane.b32.xlu0 %v889, 88
        %v1130 = vpop.permute.xlu0 %1129
        %v1132 = vsel %vm894, %v1128, 0
        %v1135 = vsel %vm894, %v1130, 0
        %1137 = vmatprep.subr.bf16.mxu0 0
        %1138 = vmatpush1.bf16.xpose.msra.mxu0 %v1135
        %1139 = vmatprep.subr.bf16.mxu0 0
        %1140 = vmatpush1.bf16.xpose.msra.mxu0 0
        %1141 = vmatprep.subr.bf16.mxu0 0
        %1142 = vmatpush1.bf16.xpose.msra.mxu0 0
        %1143 = vmatprep.subr.bf16.mxu0 0
        %1144 = vmatpush1.bf16.xpose.msra.mxu0 0
        %1145 = vmatprep.subr.bf16.mxu0 0
        %1146 = vmatpush1.bf16.xpose.msra.mxu0 0
        %1147 = vmatprep.subr.bf16.mxu0 0
        %1148 = vmatpush1.bf16.xpose.msra.mxu0 0
        %1149 = vmatprep.subr.bf16.mxu0 0
        %1150 = vmatpush1.bf16.xpose.msra.mxu0 0
        %1151 = vmatprep.subr.bf16.mxu0 0
        %1152 = vmatpush1.bf16.xpose.msra.mxu0 0
        %1153 = vmatprep.subr.bf16.mxu0 0
        %1154 = vmatpush1.bf16.xpose.msra.mxu0 0
        %1155 = vmatprep.subr.bf16.mxu0 0
        %1156 = vmatpush1.bf16.xpose.msra.mxu0 0
        %1157 = vmatprep.subr.bf16.mxu0 0
        %1158 = vmatpush1.bf16.xpose.msra.mxu0 0
        %1159 = vmatprep.subr.bf16.mxu0 0
        %1160 = vmatpush1.bf16.xpose.msra.mxu0 0
        %1161 = vmatprep.subr.bf16.mxu0 0
        %1162 = vmatpush1.bf16.xpose.msra.mxu0 0
        %1163 = vmatprep.subr.bf16.mxu0 0
        %1164 = vmatpush1.bf16.xpose.msra.mxu0 0
        %1165 = vmatprep.subr.bf16.mxu0 0
        %1166 = vmatpush1.bf16.xpose.msra.mxu0 0
        %1167 = vmatprep.subr.bf16.mxu0 0
        %1168 = vmatpush1.bf16.xpose.msra.mxu0 0
        %1169 = vmatprep.mubr.bf16.mxu0 0
        %1170 = vmatmul.mubr.bf16.gmra.mrb[0].mxu0 %v1132
        %v1171 = vpop.f32.mrb[0].mxu0
        %v1172 = vadd.f32 0.0, %v1171
        %v1173 = vpop.f32.mrb[0].mxu0
        %v1174 = vpop.f32.mrb[0].mxu0
        %v1175 = vpop.f32.mrb[0].mxu0
        %1176 = vdwg.mxu0
        %1177 = vrot.lane.b32.xlu0 %v890, 120
        %v1178 = vpop.permute.xlu0 %1177
        %1179 = vrot.lane.b32.xlu0 %v890, 88
        %v1180 = vpop.permute.xlu0 %1179
        %v1182 = vsel %vm894, %v1178, 0
        %v1185 = vsel %vm894, %v1180, 0
        %1187 = vmatprep.subr.bf16.mxu0 0
        %1188 = vmatpush1.bf16.xpose.msra.mxu0 %v1185
        %1189 = vmatprep.subr.bf16.mxu0 0
        %1190 = vmatpush1.bf16.xpose.msra.mxu0 0
        %1191 = vmatprep.subr.bf16.mxu0 0
        %1192 = vmatpush1.bf16.xpose.msra.mxu0 0
        %1193 = vmatprep.subr.bf16.mxu0 0
        %1194 = vmatpush1.bf16.xpose.msra.mxu0 0
        %1195 = vmatprep.subr.bf16.mxu0 0
        %1196 = vmatpush1.bf16.xpose.msra.mxu0 0
        %1197 = vmatprep.subr.bf16.mxu0 0
        %1198 = vmatpush1.bf16.xpose.msra.mxu0 0
        %1199 = vmatprep.subr.bf16.mxu0 0
        %1200 = vmatpush1.bf16.xpose.msra.mxu0 0
        %1201 = vmatprep.subr.bf16.mxu0 0
        %1202 = vmatpush1.bf16.xpose.msra.mxu0 0
        %1203 = vmatprep.subr.bf16.mxu0 0
        %1204 = vmatpush1.bf16.xpose.msra.mxu0 0
        %1205 = vmatprep.subr.bf16.mxu0 0
        %1206 = vmatpush1.bf16.xpose.msra.mxu0 0
        %1207 = vmatprep.subr.bf16.mxu0 0
        %1208 = vmatpush1.bf16.xpose.msra.mxu0 0
        %1209 = vmatprep.subr.bf16.mxu0 0
        %1210 = vmatpush1.bf16.xpose.msra.mxu0 0
        %1211 = vmatprep.subr.bf16.mxu0 0
        %1212 = vmatpush1.bf16.xpose.msra.mxu0 0
        %1213 = vmatprep.subr.bf16.mxu0 0
        %1214 = vmatpush1.bf16.xpose.msra.mxu0 0
        %1215 = vmatprep.subr.bf16.mxu0 0
        %1216 = vmatpush1.bf16.xpose.msra.mxu0 0
        %1217 = vmatprep.subr.bf16.mxu0 0
        %1218 = vmatpush1.bf16.xpose.msra.mxu0 0
        %1219 = vmatprep.mubr.bf16.mxu0 0
        %1220 = vmatmul.mubr.bf16.gmra.mrb[0].mxu0 %v1182
        %v1221 = vpop.f32.mrb[0].mxu0
        %v1222 = vadd.f32 0.0, %v1221
        %v1223 = vpop.f32.mrb[0].mxu0
        %v1224 = vpop.f32.mrb[0].mxu0
        %v1225 = vpop.f32.mrb[0].mxu0
        %1226 = vdwg.mxu0
        %v1227 = vmul.f32 %v1172, 0.35355338
        %v1228 = vmul.f32 %v1222, 0.35355338
        %v1229 = vadd.f32 %v1227, %v997
        %v1230 = vadd.f32 %v1228, %v1001
        %v1231 = vsel %vm894, %v1229, -inf
        %1232 = vmax.xlane.f32.xlu0 %v1231
        %v1233 = vpop.xlane.xlu0 %1232
        %v1234 = vsel %vm894, %v1230, -inf
        %1235 = vmax.xlane.f32.xlu0 %v1234
        %v1236 = vpop.xlane.xlu0 %1235
        %v1237 = vsub.f32 %v1229, %v1233
        %v1238 = vsub.f32 %v1230, %v1236
        %v1239 = vmul.f32 %v1237, 1.442695
        %v1240 = vpow.pop %v1239
        %v1241 = vmul.f32 %v1238, 1.442695
        %v1242 = vpow.pop %v1241
        %v1243 = vsel %vm894, %v1240, 0.0
        %1244 = vadd.xlane.f32.xlu0 %v1243
        %v1245 = vpop.xlane.xlu0 %1244
        %v1246 = vsel %vm894, %v1242, 0.0
        %1247 = vadd.xlane.f32.xlu0 %v1246
        %v1248 = vpop.xlane.xlu0 %1247
        %v1249 = vrcp.pop %v1245
        %v1250 = vrcp.pop %v1248
        %v1251 = vmul.f32 %v1240, %v1249
        %v1252 = vmul.f32 %v1242, %v1250
        %v1253 = vpack.c.bf16 %v1251, %v1251
        %v1254 = vpack.c.bf16 %v1252, %v1252
        %1255 = vrot.lane.b32.xlu0 %v889, 56
        %v1256 = vpop.permute.xlu0 %1255
        %v1258 = vsel %vm894, %v1253, 0
        %v1261 = vsel %vm1035, %v1256, 0
        %1263 = vmatprep.subr.bf16.mxu0 0
        %1264 = vmatpush1.bf16.msra.mxu0 %v1261
        %1265 = vmatprep.subr.bf16.mxu0 0
        %1266 = vmatpush1.bf16.msra.mxu0 0
        %1267 = vmatprep.subr.bf16.mxu0 0
        %1268 = vmatpush1.bf16.msra.mxu0 0
        %1269 = vmatprep.subr.bf16.mxu0 0
        %1270 = vmatpush1.bf16.msra.mxu0 0
        %1271 = vmatprep.subr.bf16.mxu0 0
        %1272 = vmatpush1.bf16.msra.mxu0 0
        %1273 = vmatprep.subr.bf16.mxu0 0
        %1274 = vmatpush1.bf16.msra.mxu0 0
        %1275 = vmatprep.subr.bf16.mxu0 0
        %1276 = vmatpush1.bf16.msra.mxu0 0
        %1277 = vmatprep.subr.bf16.mxu0 0
        %1278 = vmatpush1.bf16.msra.mxu0 0
        %1279 = vmatprep.subr.bf16.mxu0 0
        %1280 = vmatpush1.bf16.msra.mxu0 0
        %1281 = vmatprep.subr.bf16.mxu0 0
        %1282 = vmatpush1.bf16.msra.mxu0 0
        %1283 = vmatprep.subr.bf16.mxu0 0
        %1284 = vmatpush1.bf16.msra.mxu0 0
        %1285 = vmatprep.subr.bf16.mxu0 0
        %1286 = vmatpush1.bf16.msra.mxu0 0
        %1287 = vmatprep.subr.bf16.mxu0 0
        %1288 = vmatpush1.bf16.msra.mxu0 0
        %1289 = vmatprep.subr.bf16.mxu0 0
        %1290 = vmatpush1.bf16.msra.mxu0 0
        %1291 = vmatprep.subr.bf16.mxu0 0
        %1292 = vmatpush1.bf16.msra.mxu0 0
        %1293 = vmatprep.subr.bf16.mxu0 0
        %1294 = vmatpush1.bf16.msra.mxu0 0
        %1295 = vmatprep.mubr.bf16.mxu0 0
        %1296 = vmatmul.mubr.bf16.gmra.mrb[0].mxu0 %v1258
        %v1297 = vpop.f32.mrb[0].mxu0
        %v1298 = vadd.f32 0.0, %v1297
        %v1299 = vpop.f32.mrb[0].mxu0
        %v1300 = vpop.f32.mrb[0].mxu0
        %v1301 = vpop.f32.mrb[0].mxu0
        %1302 = vdwg.mxu0
        %1303 = vrot.lane.b32.xlu0 %v890, 56
        %v1304 = vpop.permute.xlu0 %1303
        %v1306 = vsel %vm894, %v1254, 0
        %v1309 = vsel %vm1035, %v1304, 0
        %1311 = vmatprep.subr.bf16.mxu0 0
        %1312 = vmatpush1.bf16.msra.mxu0 %v1309
        %1313 = vmatprep.subr.bf16.mxu0 0
        %1314 = vmatpush1.bf16.msra.mxu0 0
        %1315 = vmatprep.subr.bf16.mxu0 0
        %1316 = vmatpush1.bf16.msra.mxu0 0
        %1317 = vmatprep.subr.bf16.mxu0 0
        %1318 = vmatpush1.bf16.msra.mxu0 0
        %1319 = vmatprep.subr.bf16.mxu0 0
        %1320 = vmatpush1.bf16.msra.mxu0 0
        %1321 = vmatprep.subr.bf16.mxu0 0
        %1322 = vmatpush1.bf16.msra.mxu0 0
        %1323 = vmatprep.subr.bf16.mxu0 0
        %1324 = vmatpush1.bf16.msra.mxu0 0
        %1325 = vmatprep.subr.bf16.mxu0 0
        %1326 = vmatpush1.bf16.msra.mxu0 0
        %1327 = vmatprep.subr.bf16.mxu0 0
        %1328 = vmatpush1.bf16.msra.mxu0 0
        %1329 = vmatprep.subr.bf16.mxu0 0
        %1330 = vmatpush1.bf16.msra.mxu0 0
        %1331 = vmatprep.subr.bf16.mxu0 0
        %1332 = vmatpush1.bf16.msra.mxu0 0
        %1333 = vmatprep.subr.bf16.mxu0 0
        %1334 = vmatpush1.bf16.msra.mxu0 0
        %1335 = vmatprep.subr.bf16.mxu0 0
        %1336 = vmatpush1.bf16.msra.mxu0 0
        %1337 = vmatprep.subr.bf16.mxu0 0
        %1338 = vmatpush1.bf16.msra.mxu0 0
        %1339 = vmatprep.subr.bf16.mxu0 0
        %1340 = vmatpush1.bf16.msra.mxu0 0
        %1341 = vmatprep.subr.bf16.mxu0 0
        %1342 = vmatpush1.bf16.msra.mxu0 0
        %1343 = vmatprep.mubr.bf16.mxu0 0
        %1344 = vmatmul.mubr.bf16.gmra.mrb[0].mxu0 %v1306
        %v1345 = vpop.f32.mrb[0].mxu0
        %v1346 = vadd.f32 0.0, %v1345
        %v1347 = vpop.f32.mrb[0].mxu0
        %v1348 = vpop.f32.mrb[0].mxu0
        %v1349 = vpop.f32.mrb[0].mxu0
        %1350 = vdwg.mxu0
        %1351 = vrot.lane.b32.xlu0 %v889, 112
        %v1352 = vpop.permute.xlu0 %1351
        %1353 = vrot.lane.b32.xlu0 %v889, 80
        %v1354 = vpop.permute.xlu0 %1353
        %v1356 = vsel %vm894, %v1352, 0
        %v1359 = vsel %vm894, %v1354, 0
        %1361 = vmatprep.subr.bf16.mxu0 0
        %1362 = vmatpush1.bf16.xpose.msra.mxu0 %v1359
        %1363 = vmatprep.subr.bf16.mxu0 0
        %1364 = vmatpush1.bf16.xpose.msra.mxu0 0
        %1365 = vmatprep.subr.bf16.mxu0 0
        %1366 = vmatpush1.bf16.xpose.msra.mxu0 0
        %1367 = vmatprep.subr.bf16.mxu0 0
        %1368 = vmatpush1.bf16.xpose.msra.mxu0 0
        %1369 = vmatprep.subr.bf16.mxu0 0
        %1370 = vmatpush1.bf16.xpose.msra.mxu0 0
        %1371 = vmatprep.subr.bf16.mxu0 0
        %1372 = vmatpush1.bf16.xpose.msra.mxu0 0
        %1373 = vmatprep.subr.bf16.mxu0 0
        %1374 = vmatpush1.bf16.xpose.msra.mxu0 0
        %1375 = vmatprep.subr.bf16.mxu0 0
        %1376 = vmatpush1.bf16.xpose.msra.mxu0 0
        %1377 = vmatprep.subr.bf16.mxu0 0
        %1378 = vmatpush1.bf16.xpose.msra.mxu0 0
        %1379 = vmatprep.subr.bf16.mxu0 0
        %1380 = vmatpush1.bf16.xpose.msra.mxu0 0
        %1381 = vmatprep.subr.bf16.mxu0 0
        %1382 = vmatpush1.bf16.xpose.msra.mxu0 0
        %1383 = vmatprep.subr.bf16.mxu0 0
        %1384 = vmatpush1.bf16.xpose.msra.mxu0 0
        %1385 = vmatprep.subr.bf16.mxu0 0
        %1386 = vmatpush1.bf16.xpose.msra.mxu0 0
        %1387 = vmatprep.subr.bf16.mxu0 0
        %1388 = vmatpush1.bf16.xpose.msra.mxu0 0
        %1389 = vmatprep.subr.bf16.mxu0 0
        %1390 = vmatpush1.bf16.xpose.msra.mxu0 0
        %1391 = vmatprep.subr.bf16.mxu0 0
        %1392 = vmatpush1.bf16.xpose.msra.mxu0 0
        %1393 = vmatprep.mubr.bf16.mxu0 0
        %1394 = vmatmul.mubr.bf16.gmra.mrb[0].mxu0 %v1356
        %v1395 = vpop.f32.mrb[0].mxu0
        %v1396 = vadd.f32 0.0, %v1395
        %v1397 = vpop.f32.mrb[0].mxu0
        %v1398 = vpop.f32.mrb[0].mxu0
        %v1399 = vpop.f32.mrb[0].mxu0
        %1400 = vdwg.mxu0
        %1401 = vrot.lane.b32.xlu0 %v890, 112
        %v1402 = vpop.permute.xlu0 %1401
        %1403 = vrot.lane.b32.xlu0 %v890, 80
        %v1404 = vpop.permute.xlu0 %1403
        %v1406 = vsel %vm894, %v1402, 0
        %v1409 = vsel %vm894, %v1404, 0
        %1411 = vmatprep.subr.bf16.mxu0 0
        %1412 = vmatpush1.bf16.xpose.msra.mxu0 %v1409
        %1413 = vmatprep.subr.bf16.mxu0 0
        %1414 = vmatpush1.bf16.xpose.msra.mxu0 0
        %1415 = vmatprep.subr.bf16.mxu0 0
        %1416 = vmatpush1.bf16.xpose.msra.mxu0 0
        %1417 = vmatprep.subr.bf16.mxu0 0
        %1418 = vmatpush1.bf16.xpose.msra.mxu0 0
        %1419 = vmatprep.subr.bf16.mxu0 0
        %1420 = vmatpush1.bf16.xpose.msra.mxu0 0
        %1421 = vmatprep.subr.bf16.mxu0 0
        %1422 = vmatpush1.bf16.xpose.msra.mxu0 0
        %1423 = vmatprep.subr.bf16.mxu0 0
        %1424 = vmatpush1.bf16.xpose.msra.mxu0 0
        %1425 = vmatprep.subr.bf16.mxu0 0
        %1426 = vmatpush1.bf16.xpose.msra.mxu0 0
        %1427 = vmatprep.subr.bf16.mxu0 0
        %1428 = vmatpush1.bf16.xpose.msra.mxu0 0
        %1429 = vmatprep.subr.bf16.mxu0 0
        %1430 = vmatpush1.bf16.xpose.msra.mxu0 0
        %1431 = vmatprep.subr.bf16.mxu0 0
        %1432 = vmatpush1.bf16.xpose.msra.mxu0 0
        %1433 = vmatprep.subr.bf16.mxu0 0
        %1434 = vmatpush1.bf16.xpose.msra.mxu0 0
        %1435 = vmatprep.subr.bf16.mxu0 0
        %1436 = vmatpush1.bf16.xpose.msra.mxu0 0
        %1437 = vmatprep.subr.bf16.mxu0 0
        %1438 = vmatpush1.bf16.xpose.msra.mxu0 0
        %1439 = vmatprep.subr.bf16.mxu0 0
        %1440 = vmatpush1.bf16.xpose.msra.mxu0 0
        %1441 = vmatprep.subr.bf16.mxu0 0
        %1442 = vmatpush1.bf16.xpose.msra.mxu0 0
        %1443 = vmatprep.mubr.bf16.mxu0 0
        %1444 = vmatmul.mubr.bf16.gmra.mrb[0].mxu0 %v1406
        %v1445 = vpop.f32.mrb[0].mxu0
        %v1446 = vadd.f32 0.0, %v1445
        %v1447 = vpop.f32.mrb[0].mxu0
        %v1448 = vpop.f32.mrb[0].mxu0
        %v1449 = vpop.f32.mrb[0].mxu0
        %1450 = vdwg.mxu0
        %v1451 = vmul.f32 %v1396, 0.35355338
        %v1452 = vmul.f32 %v1446, 0.35355338
        %v1453 = vadd.f32 %v1451, %v997
        %v1454 = vadd.f32 %v1452, %v1001
        %v1455 = vsel %vm894, %v1453, -inf
        %1456 = vmax.xlane.f32.xlu0 %v1455
        %v1457 = vpop.xlane.xlu0 %1456
        %v1458 = vsel %vm894, %v1454, -inf
        %1459 = vmax.xlane.f32.xlu0 %v1458
        %v1460 = vpop.xlane.xlu0 %1459
        %v1461 = vsub.f32 %v1453, %v1457
        %v1462 = vsub.f32 %v1454, %v1460
        %v1463 = vmul.f32 %v1461, 1.442695
        %v1464 = vpow.pop %v1463
        %v1465 = vmul.f32 %v1462, 1.442695
        %v1466 = vpow.pop %v1465
        %v1467 = vsel %vm894, %v1464, 0.0
        %1468 = vadd.xlane.f32.xlu0 %v1467
        %v1469 = vpop.xlane.xlu0 %1468
        %v1470 = vsel %vm894, %v1466, 0.0
        %1471 = vadd.xlane.f32.xlu0 %v1470
        %v1472 = vpop.xlane.xlu0 %1471
        %v1473 = vrcp.pop %v1469
        %v1474 = vrcp.pop %v1472
        %v1475 = vmul.f32 %v1464, %v1473
        %v1476 = vmul.f32 %v1466, %v1474
        %v1477 = vpack.c.bf16 %v1475, %v1475
        %v1478 = vpack.c.bf16 %v1476, %v1476
        %1479 = vrot.lane.b32.xlu0 %v889, 48
        %v1480 = vpop.permute.xlu0 %1479
        %v1482 = vsel %vm894, %v1477, 0
        %v1485 = vsel %vm1035, %v1480, 0
        %1487 = vmatprep.subr.bf16.mxu0 0
        %1488 = vmatpush1.bf16.msra.mxu0 %v1485
        %1489 = vmatprep.subr.bf16.mxu0 0
        %1490 = vmatpush1.bf16.msra.mxu0 0
        %1491 = vmatprep.subr.bf16.mxu0 0
        %1492 = vmatpush1.bf16.msra.mxu0 0
        %1493 = vmatprep.subr.bf16.mxu0 0
        %1494 = vmatpush1.bf16.msra.mxu0 0
        %1495 = vmatprep.subr.bf16.mxu0 0
        %1496 = vmatpush1.bf16.msra.mxu0 0
        %1497 = vmatprep.subr.bf16.mxu0 0
        %1498 = vmatpush1.bf16.msra.mxu0 0
        %1499 = vmatprep.subr.bf16.mxu0 0
        %1500 = vmatpush1.bf16.msra.mxu0 0
        %1501 = vmatprep.subr.bf16.mxu0 0
        %1502 = vmatpush1.bf16.msra.mxu0 0
        %1503 = vmatprep.subr.bf16.mxu0 0
        %1504 = vmatpush1.bf16.msra.mxu0 0
        %1505 = vmatprep.subr.bf16.mxu0 0
        %1506 = vmatpush1.bf16.msra.mxu0 0
        %1507 = vmatprep.subr.bf16.mxu0 0
        %1508 = vmatpush1.bf16.msra.mxu0 0
        %1509 = vmatprep.subr.bf16.mxu0 0
        %1510 = vmatpush1.bf16.msra.mxu0 0
        %1511 = vmatprep.subr.bf16.mxu0 0
        %1512 = vmatpush1.bf16.msra.mxu0 0
        %1513 = vmatprep.subr.bf16.mxu0 0
        %1514 = vmatpush1.bf16.msra.mxu0 0
        %1515 = vmatprep.subr.bf16.mxu0 0
        %1516 = vmatpush1.bf16.msra.mxu0 0
        %1517 = vmatprep.subr.bf16.mxu0 0
        %1518 = vmatpush1.bf16.msra.mxu0 0
        %1519 = vmatprep.mubr.bf16.mxu0 0
        %1520 = vmatmul.mubr.bf16.gmra.mrb[0].mxu0 %v1482
        %v1521 = vpop.f32.mrb[0].mxu0
        %v1522 = vadd.f32 0.0, %v1521
        %v1523 = vpop.f32.mrb[0].mxu0
        %v1524 = vpop.f32.mrb[0].mxu0
        %v1525 = vpop.f32.mrb[0].mxu0
        %1526 = vdwg.mxu0
        %1527 = vrot.lane.b32.xlu0 %v890, 48
        %v1528 = vpop.permute.xlu0 %1527
        %v1530 = vsel %vm894, %v1478, 0
        %v1533 = vsel %vm1035, %v1528, 0
        %1535 = vmatprep.subr.bf16.mxu0 0
        %1536 = vmatpush1.bf16.msra.mxu0 %v1533
        %1537 = vmatprep.subr.bf16.mxu0 0
        %1538 = vmatpush1.bf16.msra.mxu0 0
        %1539 = vmatprep.subr.bf16.mxu0 0
        %1540 = vmatpush1.bf16.msra.mxu0 0
        %1541 = vmatprep.subr.bf16.mxu0 0
        %1542 = vmatpush1.bf16.msra.mxu0 0
        %1543 = vmatprep.subr.bf16.mxu0 0
        %1544 = vmatpush1.bf16.msra.mxu0 0
        %1545 = vmatprep.subr.bf16.mxu0 0
        %1546 = vmatpush1.bf16.msra.mxu0 0
        %1547 = vmatprep.subr.bf16.mxu0 0
        %1548 = vmatpush1.bf16.msra.mxu0 0
        %1549 = vmatprep.subr.bf16.mxu0 0
        %1550 = vmatpush1.bf16.msra.mxu0 0
        %1551 = vmatprep.subr.bf16.mxu0 0
        %1552 = vmatpush1.bf16.msra.mxu0 0
        %1553 = vmatprep.subr.bf16.mxu0 0
        %1554 = vmatpush1.bf16.msra.mxu0 0
        %1555 = vmatprep.subr.bf16.mxu0 0
        %1556 = vmatpush1.bf16.msra.mxu0 0
        %1557 = vmatprep.subr.bf16.mxu0 0
        %1558 = vmatpush1.bf16.msra.mxu0 0
        %1559 = vmatprep.subr.bf16.mxu0 0
        %1560 = vmatpush1.bf16.msra.mxu0 0
        %1561 = vmatprep.subr.bf16.mxu0 0
        %1562 = vmatpush1.bf16.msra.mxu0 0
        %1563 = vmatprep.subr.bf16.mxu0 0
        %1564 = vmatpush1.bf16.msra.mxu0 0
        %1565 = vmatprep.subr.bf16.mxu0 0
        %1566 = vmatpush1.bf16.msra.mxu0 0
        %1567 = vmatprep.mubr.bf16.mxu0 0
        %1568 = vmatmul.mubr.bf16.gmra.mrb[0].mxu0 %v1530
        %v1569 = vpop.f32.mrb[0].mxu0
        %v1570 = vadd.f32 0.0, %v1569
        %v1571 = vpop.f32.mrb[0].mxu0
        %v1572 = vpop.f32.mrb[0].mxu0
        %v1573 = vpop.f32.mrb[0].mxu0
        %1574 = vdwg.mxu0
        %1575 = vrot.lane.b32.xlu0 %v889, 104
        %v1576 = vpop.permute.xlu0 %1575
        %1577 = vrot.lane.b32.xlu0 %v889, 72
        %v1578 = vpop.permute.xlu0 %1577
        %v1580 = vsel %vm894, %v1576, 0
        %v1583 = vsel %vm894, %v1578, 0
        %1585 = vmatprep.subr.bf16.mxu0 0
        %1586 = vmatpush1.bf16.xpose.msra.mxu0 %v1583
        %1587 = vmatprep.subr.bf16.mxu0 0
        %1588 = vmatpush1.bf16.xpose.msra.mxu0 0
        %1589 = vmatprep.subr.bf16.mxu0 0
        %1590 = vmatpush1.bf16.xpose.msra.mxu0 0
        %1591 = vmatprep.subr.bf16.mxu0 0
        %1592 = vmatpush1.bf16.xpose.msra.mxu0 0
        %1593 = vmatprep.subr.bf16.mxu0 0
        %1594 = vmatpush1.bf16.xpose.msra.mxu0 0
        %1595 = vmatprep.subr.bf16.mxu0 0
        %1596 = vmatpush1.bf16.xpose.msra.mxu0 0
        %1597 = vmatprep.subr.bf16.mxu0 0
        %1598 = vmatpush1.bf16.xpose.msra.mxu0 0
        %1599 = vmatprep.subr.bf16.mxu0 0
        %1600 = vmatpush1.bf16.xpose.msra.mxu0 0
        %1601 = vmatprep.subr.bf16.mxu0 0
        %1602 = vmatpush1.bf16.xpose.msra.mxu0 0
        %1603 = vmatprep.subr.bf16.mxu0 0
        %1604 = vmatpush1.bf16.xpose.msra.mxu0 0
        %1605 = vmatprep.subr.bf16.mxu0 0
        %1606 = vmatpush1.bf16.xpose.msra.mxu0 0
        %1607 = vmatprep.subr.bf16.mxu0 0
        %1608 = vmatpush1.bf16.xpose.msra.mxu0 0
        %1609 = vmatprep.subr.bf16.mxu0 0
        %1610 = vmatpush1.bf16.xpose.msra.mxu0 0
        %1611 = vmatprep.subr.bf16.mxu0 0
        %1612 = vmatpush1.bf16.xpose.msra.mxu0 0
        %1613 = vmatprep.subr.bf16.mxu0 0
        %1614 = vmatpush1.bf16.xpose.msra.mxu0 0
        %1615 = vmatprep.subr.bf16.mxu0 0
        %1616 = vmatpush1.bf16.xpose.msra.mxu0 0
        %1617 = vmatprep.mubr.bf16.mxu0 0
        %1618 = vmatmul.mubr.bf16.gmra.mrb[0].mxu0 %v1580
        %v1619 = vpop.f32.mrb[0].mxu0
        %v1620 = vadd.f32 0.0, %v1619
        %v1621 = vpop.f32.mrb[0].mxu0
        %v1622 = vpop.f32.mrb[0].mxu0
        %v1623 = vpop.f32.mrb[0].mxu0
        %1624 = vdwg.mxu0
        %1625 = vrot.lane.b32.xlu0 %v890, 104
        %v1626 = vpop.permute.xlu0 %1625
        %1627 = vrot.lane.b32.xlu0 %v890, 72
        %v1628 = vpop.permute.xlu0 %1627
        %v1630 = vsel %vm894, %v1626, 0
        %v1633 = vsel %vm894, %v1628, 0
        %1635 = vmatprep.subr.bf16.mxu0 0
        %1636 = vmatpush1.bf16.xpose.msra.mxu0 %v1633
        %1637 = vmatprep.subr.bf16.mxu0 0
        %1638 = vmatpush1.bf16.xpose.msra.mxu0 0
        %1639 = vmatprep.subr.bf16.mxu0 0
        %1640 = vmatpush1.bf16.xpose.msra.mxu0 0
        %1641 = vmatprep.subr.bf16.mxu0 0
        %1642 = vmatpush1.bf16.xpose.msra.mxu0 0
        %1643 = vmatprep.subr.bf16.mxu0 0
        %1644 = vmatpush1.bf16.xpose.msra.mxu0 0
        %1645 = vmatprep.subr.bf16.mxu0 0
        %1646 = vmatpush1.bf16.xpose.msra.mxu0 0
        %1647 = vmatprep.subr.bf16.mxu0 0
        %1648 = vmatpush1.bf16.xpose.msra.mxu0 0
        %1649 = vmatprep.subr.bf16.mxu0 0
        %1650 = vmatpush1.bf16.xpose.msra.mxu0 0
        %1651 = vmatprep.subr.bf16.mxu0 0
        %1652 = vmatpush1.bf16.xpose.msra.mxu0 0
        %1653 = vmatprep.subr.bf16.mxu0 0
        %1654 = vmatpush1.bf16.xpose.msra.mxu0 0
        %1655 = vmatprep.subr.bf16.mxu0 0
        %1656 = vmatpush1.bf16.xpose.msra.mxu0 0
        %1657 = vmatprep.subr.bf16.mxu0 0
        %1658 = vmatpush1.bf16.xpose.msra.mxu0 0
        %1659 = vmatprep.subr.bf16.mxu0 0
        %1660 = vmatpush1.bf16.xpose.msra.mxu0 0
        %1661 = vmatprep.subr.bf16.mxu0 0
        %1662 = vmatpush1.bf16.xpose.msra.mxu0 0
        %1663 = vmatprep.subr.bf16.mxu0 0
        %1664 = vmatpush1.bf16.xpose.msra.mxu0 0
        %1665 = vmatprep.subr.bf16.mxu0 0
        %1666 = vmatpush1.bf16.xpose.msra.mxu0 0
        %1667 = vmatprep.mubr.bf16.mxu0 0
        %1668 = vmatmul.mubr.bf16.gmra.mrb[0].mxu0 %v1630
        %v1669 = vpop.f32.mrb[0].mxu0
        %v1670 = vadd.f32 0.0, %v1669
        %v1671 = vpop.f32.mrb[0].mxu0
        %v1672 = vpop.f32.mrb[0].mxu0
        %v1673 = vpop.f32.mrb[0].mxu0
        %1674 = vdwg.mxu0
        %v1675 = vmul.f32 %v1620, 0.35355338
        %v1676 = vmul.f32 %v1670, 0.35355338
        %v1677 = vadd.f32 %v1675, %v997
        %v1678 = vadd.f32 %v1676, %v1001
        %v1679 = vsel %vm894, %v1677, -inf
        %1680 = vmax.xlane.f32.xlu0 %v1679
        %v1681 = vpop.xlane.xlu0 %1680
        %v1682 = vsel %vm894, %v1678, -inf
        %1683 = vmax.xlane.f32.xlu0 %v1682
        %v1684 = vpop.xlane.xlu0 %1683
        %v1685 = vsub.f32 %v1677, %v1681
        %v1686 = vsub.f32 %v1678, %v1684
        %v1687 = vmul.f32 %v1685, 1.442695
        %v1688 = vpow.pop %v1687
        %v1689 = vmul.f32 %v1686, 1.442695
        %v1690 = vpow.pop %v1689
        %v1691 = vsel %vm894, %v1688, 0.0
        %1692 = vadd.xlane.f32.xlu0 %v1691
        %v1693 = vpop.xlane.xlu0 %1692
        %v1694 = vsel %vm894, %v1690, 0.0
        %1695 = vadd.xlane.f32.xlu0 %v1694
        %v1696 = vpop.xlane.xlu0 %1695
        %v1697 = vrcp.pop %v1693
        %v1698 = vrcp.pop %v1696
        %v1699 = vmul.f32 %v1688, %v1697
        %v1700 = vmul.f32 %v1690, %v1698
        %v1701 = vpack.c.bf16 %v1699, %v1699
        %v1702 = vpack.c.bf16 %v1700, %v1700
        %1703 = vrot.lane.b32.xlu0 %v889, 40
        %v1704 = vpop.permute.xlu0 %1703
        %v1706 = vsel %vm894, %v1701, 0
        %v1709 = vsel %vm1035, %v1704, 0
        %1711 = vmatprep.subr.bf16.mxu0 0
        %1712 = vmatpush1.bf16.msra.mxu0 %v1709
        %1713 = vmatprep.subr.bf16.mxu0 0
        %1714 = vmatpush1.bf16.msra.mxu0 0
        %1715 = vmatprep.subr.bf16.mxu0 0
        %1716 = vmatpush1.bf16.msra.mxu0 0
        %1717 = vmatprep.subr.bf16.mxu0 0
        %1718 = vmatpush1.bf16.msra.mxu0 0
        %1719 = vmatprep.subr.bf16.mxu0 0
        %1720 = vmatpush1.bf16.msra.mxu0 0
        %1721 = vmatprep.subr.bf16.mxu0 0
        %1722 = vmatpush1.bf16.msra.mxu0 0
        %1723 = vmatprep.subr.bf16.mxu0 0
        %1724 = vmatpush1.bf16.msra.mxu0 0
        %1725 = vmatprep.subr.bf16.mxu0 0
        %1726 = vmatpush1.bf16.msra.mxu0 0
        %1727 = vmatprep.subr.bf16.mxu0 0
        %1728 = vmatpush1.bf16.msra.mxu0 0
        %1729 = vmatprep.subr.bf16.mxu0 0
        %1730 = vmatpush1.bf16.msra.mxu0 0
        %1731 = vmatprep.subr.bf16.mxu0 0
        %1732 = vmatpush1.bf16.msra.mxu0 0
        %1733 = vmatprep.subr.bf16.mxu0 0
        %1734 = vmatpush1.bf16.msra.mxu0 0
        %1735 = vmatprep.subr.bf16.mxu0 0
        %1736 = vmatpush1.bf16.msra.mxu0 0
        %1737 = vmatprep.subr.bf16.mxu0 0
        %1738 = vmatpush1.bf16.msra.mxu0 0
        %1739 = vmatprep.subr.bf16.mxu0 0
        %1740 = vmatpush1.bf16.msra.mxu0 0
        %1741 = vmatprep.subr.bf16.mxu0 0
        %1742 = vmatpush1.bf16.msra.mxu0 0
        %1743 = vmatprep.mubr.bf16.mxu0 0
        %1744 = vmatmul.mubr.bf16.gmra.mrb[0].mxu0 %v1706
        %v1745 = vpop.f32.mrb[0].mxu0
        %v1746 = vadd.f32 0.0, %v1745
        %v1747 = vpop.f32.mrb[0].mxu0
        %v1748 = vpop.f32.mrb[0].mxu0
        %v1749 = vpop.f32.mrb[0].mxu0
        %1750 = vdwg.mxu0
        %1751 = vrot.lane.b32.xlu0 %v890, 40
        %v1752 = vpop.permute.xlu0 %1751
        %v1754 = vsel %vm894, %v1702, 0
        %v1757 = vsel %vm1035, %v1752, 0
        %1759 = vmatprep.subr.bf16.mxu0 0
        %1760 = vmatpush1.bf16.msra.mxu0 %v1757
        %1761 = vmatprep.subr.bf16.mxu0 0
        %1762 = vmatpush1.bf16.msra.mxu0 0
        %1763 = vmatprep.subr.bf16.mxu0 0
        %1764 = vmatpush1.bf16.msra.mxu0 0
        %1765 = vmatprep.subr.bf16.mxu0 0
        %1766 = vmatpush1.bf16.msra.mxu0 0
        %1767 = vmatprep.subr.bf16.mxu0 0
        %1768 = vmatpush1.bf16.msra.mxu0 0
        %1769 = vmatprep.subr.bf16.mxu0 0
        %1770 = vmatpush1.bf16.msra.mxu0 0
        %1771 = vmatprep.subr.bf16.mxu0 0
        %1772 = vmatpush1.bf16.msra.mxu0 0
        %1773 = vmatprep.subr.bf16.mxu0 0
        %1774 = vmatpush1.bf16.msra.mxu0 0
        %1775 = vmatprep.subr.bf16.mxu0 0
        %1776 = vmatpush1.bf16.msra.mxu0 0
        %1777 = vmatprep.subr.bf16.mxu0 0
        %1778 = vmatpush1.bf16.msra.mxu0 0
        %1779 = vmatprep.subr.bf16.mxu0 0
        %1780 = vmatpush1.bf16.msra.mxu0 0
        %1781 = vmatprep.subr.bf16.mxu0 0
        %1782 = vmatpush1.bf16.msra.mxu0 0
        %1783 = vmatprep.subr.bf16.mxu0 0
        %1784 = vmatpush1.bf16.msra.mxu0 0
        %1785 = vmatprep.subr.bf16.mxu0 0
        %1786 = vmatpush1.bf16.msra.mxu0 0
        %1787 = vmatprep.subr.bf16.mxu0 0
        %1788 = vmatpush1.bf16.msra.mxu0 0
        %1789 = vmatprep.subr.bf16.mxu0 0
        %1790 = vmatpush1.bf16.msra.mxu0 0
        %1791 = vmatprep.mubr.bf16.mxu0 0
        %1792 = vmatmul.mubr.bf16.gmra.mrb[0].mxu0 %v1754
        %v1793 = vpop.f32.mrb[0].mxu0
        %v1794 = vadd.f32 0.0, %v1793
        %v1795 = vpop.f32.mrb[0].mxu0
        %v1796 = vpop.f32.mrb[0].mxu0
        %v1797 = vpop.f32.mrb[0].mxu0
        %1798 = vdwg.mxu0
        %1801 = vrot.lane.b32.xlu0 %v1298, 8
        %v1802 = vpop.permute.xlu0 %1801
        %1803 = vrot.lane.b32.xlu0 %v1346, 8
        %v1804 = vpop.permute.xlu0 %1803
        %1809 = vrot.lane.b32.xlu0 %v1522, 16
        %v1810 = vpop.permute.xlu0 %1809
        %1811 = vrot.lane.b32.xlu0 %v1570, 16
        %v1812 = vpop.permute.xlu0 %1811
        %1817 = vrot.lane.b32.xlu0 %v1746, 24
        %v1818 = vpop.permute.xlu0 %1817
        %1819 = vrot.lane.b32.xlu0 %v1794, 24
        %v1820 = vpop.permute.xlu0 %1819
        %v1823 = vsel %vm894, %v1074, %v1802
        %v1824 = vsel %vm894, %v1122, %v1804
        %vm1825 = vcmask 130048
        %v1826 = vsel %vm1825, %v1823, %v1810
        %v1827 = vsel %vm1825, %v1824, %v1812
        %vm1828 = vcmask 195584
        %v1829 = vsel %vm1828, %v1826, %v1818
        %v1830 = vsel %vm1828, %v1827, %v1820
        %v1831 = vpack.c.bf16 %v1830, %v1829
        %v1832 = vld [vmem:[%s729] sm:$0xf]
        %v1833 = vld [vmem:[%s729 + $0x4] sm:$0xf]
        %v1834 = vld [vmem:[%s729 + $0x8] sm:$0xf]
        %v1835 = vld [vmem:[%s729 + $0xc] sm:$0xf]
        %v1836 = vld [vmem:[%s732] sm:$0x1]
        %v1838 = vlaneseq
        %v1839 = vshrl.u32 %v1838, 7
        %v1840 = vsub.s32 0, %v1839
        %v1841 = vrot.slane %v1836, %v1840
        %v1847 = vunpack.c.l.b16 %v1832
        %v1848 = vunpack.c.l.b16 %v1833
        %v1849 = vunpack.c.l.b16 %v1834
        %v1850 = vunpack.c.l.b16 %v1835
        %v1851 = vpack.c.b16 %v1848, %v1847
        %v1852 = vpack.c.b16 %v1850, %v1849
        %v1856 = vsel %vm842, %v1831, 0
        %1858 = vmatprep.subr.bf16.mxu0 0
        %1859 = vmatpush1.bf16.msra.mxu0 %v1851
        %1860 = vmatprep.subr.bf16.mxu0 0
        %1861 = vmatpush1.bf16.msra.mxu0 %v1852
        %1862 = vmatprep.subr.bf16.mxu0 0
        %1863 = vmatpush1.bf16.msra.mxu0 0
        %1864 = vmatprep.subr.bf16.mxu0 0
        %1865 = vmatpush1.bf16.msra.mxu0 0
        %1866 = vmatprep.subr.bf16.mxu0 0
        %1867 = vmatpush1.bf16.msra.mxu0 0
        %1868 = vmatprep.subr.bf16.mxu0 0
        %1869 = vmatpush1.bf16.msra.mxu0 0
        %1870 = vmatprep.subr.bf16.mxu0 0
        %1871 = vmatpush1.bf16.msra.mxu0 0
        %1872 = vmatprep.subr.bf16.mxu0 0
        %1873 = vmatpush1.bf16.msra.mxu0 0
        %1874 = vmatprep.subr.bf16.mxu0 0
        %1875 = vmatpush1.bf16.msra.mxu0 0
        %1876 = vmatprep.subr.bf16.mxu0 0
        %1877 = vmatpush1.bf16.msra.mxu0 0
        %1878 = vmatprep.subr.bf16.mxu0 0
        %1879 = vmatpush1.bf16.msra.mxu0 0
        %1880 = vmatprep.subr.bf16.mxu0 0
        %1881 = vmatpush1.bf16.msra.mxu0 0
        %1882 = vmatprep.subr.bf16.mxu0 0
        %1883 = vmatpush1.bf16.msra.mxu0 0
        %1884 = vmatprep.subr.bf16.mxu0 0
        %1885 = vmatpush1.bf16.msra.mxu0 0
        %1886 = vmatprep.subr.bf16.mxu0 0
        %1887 = vmatpush1.bf16.msra.mxu0 0
        %1888 = vmatprep.subr.bf16.mxu0 0
        %1889 = vmatpush1.bf16.msra.mxu0 0
        %1890 = vmatprep.mubr.bf16.mxu0 0
        %1891 = vmatmul.mubr.bf16.gmra.mrb[0].mxu0 %v1856
        %v1892 = vpop.f32.mrb[0].mxu0
        %v1893 = vadd.f32 %v1841, %v1892
        %v1894 = vpop.f32.mrb[0].mxu0
        %v1895 = vpop.f32.mrb[0].mxu0
        %v1896 = vadd.f32 %v1841, %v1895
        %v1897 = vpop.f32.mrb[0].mxu0
        %1898 = vdwg.mxu0
        %v1899 = vadd.f32 %v1893, %v816
        %v1900 = vadd.f32 %v1896, %v817
        %v1901 = vld [vmem:[%s735] sm:$0x1]
        %v1902 = vld [vmem:[%s738] sm:$0x1]
        %v1903 = vsel %vm842, %v1899, 0.0
        %1904 = vadd.xlane.f32.xlu0 %v1903
        %v1905 = vpop.xlane.xlu0 %1904
        %v1906 = vsel %vm842, %v1900, 0.0
        %1907 = vadd.xlane.f32.xlu0 %v1906
        %v1908 = vpop.xlane.xlu0 %1907
        %v1909 = vrcp.pop 32.0
        %v1910 = vmul.f32 %v1905, %v1909
        %v1911 = vmul.f32 %v1908, %v1909
        %v1912 = vsub.f32 %v1899, %v1910
        %v1913 = vsub.f32 %v1900, %v1911
        %v1914 = vmul.f32 %v1912, %v1912
        %v1915 = vmul.f32 %v1913, %v1913
        %v1916 = vsel %vm842, %v1914, 0.0
        %1917 = vadd.xlane.f32.xlu0 %v1916
        %v1918 = vpop.xlane.xlu0 %1917
        %v1919 = vsel %vm842, %v1915, 0.0
        %1920 = vadd.xlane.f32.xlu0 %v1919
        %v1921 = vpop.xlane.xlu0 %1920
        %v1922 = vmul.f32 %v1918, %v1909
        %v1923 = vmul.f32 %v1921, %v1909
        %v1924 = vadd.f32 %v1922, 1e-12
        %v1925 = vadd.f32 %v1923, 1e-12
        %v1926 = vrsqrt.pop %v1924
        %v1927 = vrsqrt.pop %v1925
        %v1928 = vmul.f32 %v1912, %v1926
        %v1929 = vmul.f32 %v1913, %v1927
        %v1931 = vlaneseq
        %v1932 = vshrl.u32 %v1931, 7
        %v1933 = vsub.s32 0, %v1932
        %v1934 = vrot.slane %v1901, %v1933
        %v1936 = vmul.f32 %v1928, %v1934
        %v1937 = vmul.f32 %v1929, %v1934
        %v1939 = vlaneseq
        %v1940 = vshrl.u32 %v1939, 7
        %v1941 = vsub.s32 0, %v1940
        %v1942 = vrot.slane %v1902, %v1941
        %v1944 = vadd.f32 %v1936, %v1942
        %v1945 = vadd.f32 %v1937, %v1942
        %v1946 = vpack.c.bf16 %v1945, %v1944
        %v1947 = vld [vmem:[%s743] sm:$0xf]
        %v1948 = vld [vmem:[%s743 + $0x4] sm:$0xf]
        %v1949 = vld [vmem:[%s743 + $0x8] sm:$0xf]
        %v1950 = vld [vmem:[%s743 + $0xc] sm:$0xf]
        %v1951 = vld [vmem:[%s746] sm:$0x1]
        %v1953 = vlaneseq
        %v1954 = vshrl.u32 %v1953, 7
        %v1955 = vsub.s32 0, %v1954
        %v1956 = vrot.slane %v1951, %v1955
        %v1962 = vunpack.c.l.b16 %v1947
        %v1963 = vunpack.c.l.b16 %v1948
        %v1964 = vunpack.c.l.b16 %v1949
        %v1965 = vunpack.c.l.b16 %v1950
        %v1966 = vpack.c.b16 %v1963, %v1962
        %v1967 = vpack.c.b16 %v1965, %v1964
        %v1971 = vsel %vm842, %v1946, 0
        %1973 = vmatprep.subr.bf16.mxu0 0
        %1974 = vmatpush1.bf16.msra.mxu0 %v1966
        %1975 = vmatprep.subr.bf16.mxu0 0
        %1976 = vmatpush1.bf16.msra.mxu0 %v1967
        %1977 = vmatprep.subr.bf16.mxu0 0
        %1978 = vmatpush1.bf16.msra.mxu0 0
        %1979 = vmatprep.subr.bf16.mxu0 0
        %1980 = vmatpush1.bf16.msra.mxu0 0
        %1981 = vmatprep.subr.bf16.mxu0 0
        %1982 = vmatpush1.bf16.msra.mxu0 0
        %1983 = vmatprep.subr.bf16.mxu0 0
        %1984 = vmatpush1.bf16.msra.mxu0 0
        %1985 = vmatprep.subr.bf16.mxu0 0
        %1986 = vmatpush1.bf16.msra.mxu0 0
        %1987 = vmatprep.subr.bf16.mxu0 0
        %1988 = vmatpush1.bf16.msra.mxu0 0
        %1989 = vmatprep.subr.bf16.mxu0 0
        %1990 = vmatpush1.bf16.msra.mxu0 0
        %1991 = vmatprep.subr.bf16.mxu0 0
        %1992 = vmatpush1.bf16.msra.mxu0 0
        %1993 = vmatprep.subr.bf16.mxu0 0
        %1994 = vmatpush1.bf16.msra.mxu0 0
        %1995 = vmatprep.subr.bf16.mxu0 0
        %1996 = vmatpush1.bf16.msra.mxu0 0
        %1997 = vmatprep.subr.bf16.mxu0 0
        %1998 = vmatpush1.bf16.msra.mxu0 0
        %1999 = vmatprep.subr.bf16.mxu0 0
        %2000 = vmatpush1.bf16.msra.mxu0 0
        %2001 = vmatprep.subr.bf16.mxu0 0
        %2002 = vmatpush1.bf16.msra.mxu0 0
        %2003 = vmatprep.subr.bf16.mxu0 0
        %2004 = vmatpush1.bf16.msra.mxu0 0
        %2005 = vmatprep.mubr.bf16.mxu0 0
        %2006 = vmatmul.mubr.bf16.gmra.mrb[0].mxu0 %v1971
        %v2007 = vpop.f32.mrb[0].mxu0
        %v2008 = vadd.f32 %v1956, %v2007
        %v2009 = vpop.f32.mrb[0].mxu0
        %v2010 = vpop.f32.mrb[0].mxu0
        %v2011 = vadd.f32 %v1956, %v2010
        %v2012 = vpop.f32.mrb[0].mxu0
        %2013 = vdwg.mxu0
        %v2014 = vmul.f32 %v2008, 0.5
        %v2015 = vmul.f32 %v2011, 0.5
        %v2016 = vmul.f32 %v2008, 0.044715
        %v2017 = vmul.f32 %v2011, 0.044715
        %v2018 = vmul.f32 %v2016, %v2008
        %v2019 = vmul.f32 %v2017, %v2011
        %v2020 = vmul.f32 %v2018, %v2008
        %v2021 = vmul.f32 %v2019, %v2011
        %v2022 = vadd.f32 %v2008, %v2020
        %v2023 = vadd.f32 %v2011, %v2021
        %v2024 = vmul.f32 %v2022, 0.7978846
        %v2025 = vmul.f32 %v2023, 0.7978846
        %v2026 = vtanh.pop %v2024
        %v2027 = vtanh.pop %v2025
        %v2028 = vadd.f32 %v2026, 1.0
        %v2029 = vadd.f32 %v2027, 1.0
        %v2030 = vmul.f32 %v2014, %v2028
        %v2031 = vmul.f32 %v2015, %v2029
        %v2032 = vpack.c.bf16 %v2031, %v2030
        %v2033 = vld [vmem:[%s751] sm:$0xf]
        %v2034 = vld [vmem:[%s751 + $0x4] sm:$0xf]
        %v2035 = vld [vmem:[%s751 + $0x8] sm:$0xf]
        %v2036 = vld [vmem:[%s751 + $0xc] sm:$0xf]
        %v2037 = vld [vmem:[%s751 + $0x10] sm:$0xf]
        %v2038 = vld [vmem:[%s751 + $0x14] sm:$0xf]
        %v2039 = vld [vmem:[%s751 + $0x18] sm:$0xf]
        %v2040 = vld [vmem:[%s751 + $0x1c] sm:$0xf]
        %v2041 = vld [vmem:[%s754] sm:$0x1]
        %v2043 = vlaneseq
        %v2044 = vshrl.u32 %v2043, 7
        %v2045 = vsub.s32 0, %v2044
        %v2046 = vrot.slane %v2041, %v2045
        %v2056 = vunpack.c.l.b16 %v2033
        %v2057 = vunpack.c.l.b16 %v2034
        %v2058 = vunpack.c.l.b16 %v2035
        %v2059 = vunpack.c.l.b16 %v2036
        %v2060 = vunpack.c.l.b16 %v2037
        %v2061 = vunpack.c.l.b16 %v2038
        %v2062 = vunpack.c.l.b16 %v2039
        %v2063 = vunpack.c.l.b16 %v2040
        %v2064 = vpack.c.b16 %v2057, %v2056
        %v2065 = vpack.c.b16 %v2059, %v2058
        %v2066 = vpack.c.b16 %v2061, %v2060
        %v2067 = vpack.c.b16 %v2063, %v2062
        %vm2072 = vcmask 523264
        %v2074 = vsel %vm2072, %v2032, 0
        %2076 = vmatprep.subr.bf16.mxu0 0
        %2077 = vmatpush1.bf16.msra.mxu0 %v2064
        %2078 = vmatprep.subr.bf16.mxu0 0
        %2079 = vmatpush1.bf16.msra.mxu0 %v2065
        %2080 = vmatprep.subr.bf16.mxu0 0
        %2081 = vmatpush1.bf16.msra.mxu0 %v2066
        %2082 = vmatprep.subr.bf16.mxu0 0
        %2083 = vmatpush1.bf16.msra.mxu0 %v2067
        %2084 = vmatprep.subr.bf16.mxu0 0
        %2085 = vmatpush1.bf16.msra.mxu0 0
        %2086 = vmatprep.subr.bf16.mxu0 0
        %2087 = vmatpush1.bf16.msra.mxu0 0
        %2088 = vmatprep.subr.bf16.mxu0 0
        %2089 = vmatpush1.bf16.msra.mxu0 0
        %2090 = vmatprep.subr.bf16.mxu0 0
        %2091 = vmatpush1.bf16.msra.mxu0 0
        %2092 = vmatprep.subr.bf16.mxu0 0
        %2093 = vmatpush1.bf16.msra.mxu0 0
        %2094 = vmatprep.subr.bf16.mxu0 0
        %2095 = vmatpush1.bf16.msra.mxu0 0
        %2096 = vmatprep.subr.bf16.mxu0 0
        %2097 = vmatpush1.bf16.msra.mxu0 0
        %2098 = vmatprep.subr.bf16.mxu0 0
        %2099 = vmatpush1.bf16.msra.mxu0 0
        %2100 = vmatprep.subr.bf16.mxu0 0
        %2101 = vmatpush1.bf16.msra.mxu0 0
        %2102 = vmatprep.subr.bf16.mxu0 0
        %2103 = vmatpush1.bf16.msra.mxu0 0
        %2104 = vmatprep.subr.bf16.mxu0 0
        %2105 = vmatpush1.bf16.msra.mxu0 0
        %2106 = vmatprep.subr.bf16.mxu0 0
        %2107 = vmatpush1.bf16.msra.mxu0 0
        %2108 = vmatprep.mubr.bf16.mxu0 0
        %2109 = vmatmul.mubr.bf16.gmra.mrb[0].mxu0 %v2074
        %v2110 = vpop.f32.mrb[0].mxu0
        %v2111 = vadd.f32 %v2046, %v2110
        %v2112 = vpop.f32.mrb[0].mxu0
        %v2113 = vpop.f32.mrb[0].mxu0
        %v2114 = vadd.f32 %v2046, %v2113
        %v2115 = vpop.f32.mrb[0].mxu0
        %2116 = vdwg.mxu0
        %v2117 = vadd.f32 %v2111, %v1944
        %v2118 = vadd.f32 %v2114, %v1945
        %v2119 = vld [vmem:[%s757] sm:$0x1]
        %v2120 = vld [vmem:[%s760] sm:$0x1]
        %v2121 = vsel %vm842, %v2117, 0.0
        %2122 = vadd.xlane.f32.xlu0 %v2121
        %v2123 = vpop.xlane.xlu0 %2122
        %v2124 = vsel %vm842, %v2118, 0.0
        %2125 = vadd.xlane.f32.xlu0 %v2124
        %v2126 = vpop.xlane.xlu0 %2125
        %v2127 = vmul.f32 %v2123, %v1909
        %v2128 = vmul.f32 %v2126, %v1909
        %v2129 = vsub.f32 %v2117, %v2127
        %v2130 = vsub.f32 %v2118, %v2128
        %v2131 = vmul.f32 %v2129, %v2129
        %v2132 = vmul.f32 %v2130, %v2130
        %v2133 = vsel %vm842, %v2131, 0.0
        %2134 = vadd.xlane.f32.xlu0 %v2133
        %v2135 = vpop.xlane.xlu0 %2134
        %v2136 = vsel %vm842, %v2132, 0.0
        %2137 = vadd.xlane.f32.xlu0 %v2136
        %v2138 = vpop.xlane.xlu0 %2137
        %v2139 = vmul.f32 %v2135, %v1909
        %v2140 = vmul.f32 %v2138, %v1909
        %v2141 = vadd.f32 %v2139, 1e-12
        %v2142 = vadd.f32 %v2140, 1e-12
        %v2143 = vrsqrt.pop %v2141
        %v2144 = vrsqrt.pop %v2142
        %v2145 = vmul.f32 %v2129, %v2143
        %v2146 = vmul.f32 %v2130, %v2144
        %v2148 = vlaneseq
        %v2149 = vshrl.u32 %v2148, 7
        %v2150 = vsub.s32 0, %v2149
        %v2151 = vrot.slane %v2119, %v2150
        %v2153 = vmul.f32 %v2145, %v2151
        %v2154 = vmul.f32 %v2146, %v2151
        %v2156 = vlaneseq
        %v2157 = vshrl.u32 %v2156, 7
        %v2158 = vsub.s32 0, %v2157
        %v2159 = vrot.slane %v2120, %v2158
        %v2161 = vadd.f32 %v2153, %v2159
        %v2162 = vadd.f32 %v2154, %v2159
        %2163 = vst.msk [vmem:[#allocation2] sm:$0xff] %vm842, %v2161
        %2164 = vst.msk [vmem:[#allocation2 + $0x8] sm:$0xff] %vm842, %v2162
        %p2165 = scmp.eq.s32.totalorder %s31, 1
        // Predicated region
        $region101: #{basic_bert_unit_forward.1} parent=95 // pred_check
          %p2166 = pneg %p2165
        $region102: #{basic_bert_unit_forward.1} parent=95 // pred_check_branch
          %2168 = sbr.rel (%p2166) target = $region104
        $region103: #{basic_bert_unit_forward.1} parent=95 // pred_region
          %v2169 = vld [vmem:[%s2] sm:$0x1]
          %v2170 = vpack.c.bf16 %v2162, %v2161
          %v2172 = vsel %vm1825, %v2169, 0
          %2174 = vmatprep.subr.bf16.mxu0 0
          %2175 = vmatpush1.bf16.msra.mxu0 %v2170
          %2176 = vmatprep.subr.bf16.mxu0 0
          %2177 = vmatpush1.bf16.msra.mxu0 0
          %2178 = vmatprep.subr.bf16.mxu0 0
          %2179 = vmatpush1.bf16.msra.mxu0 0
          %2180 = vmatprep.subr.bf16.mxu0 0
          %2181 = vmatpush1.bf16.msra.mxu0 0
          %2182 = vmatprep.subr.bf16.mxu0 0
          %2183 = vmatpush1.bf16.msra.mxu0 0
          %2184 = vmatprep.subr.bf16.mxu0 0
          %2185 = vmatpush1.bf16.msra.mxu0 0
          %2186 = vmatprep.subr.bf16.mxu0 0
          %2187 = vmatpush1.bf16.msra.mxu0 0
          %2188 = vmatprep.subr.bf16.mxu0 0
          %2189 = vmatpush1.bf16.msra.mxu0 0
          %2190 = vmatprep.subr.bf16.mxu0 0
          %2191 = vmatpush1.bf16.msra.mxu0 0
          %2192 = vmatprep.subr.bf16.mxu0 0
          %2193 = vmatpush1.bf16.msra.mxu0 0
          %2194 = vmatprep.subr.bf16.mxu0 0
          %2195 = vmatpush1.bf16.msra.mxu0 0
          %2196 = vmatprep.subr.bf16.mxu0 0
          %2197 = vmatpush1.bf16.msra.mxu0 0
          %2198 = vmatprep.subr.bf16.mxu0 0
          %2199 = vmatpush1.bf16.msra.mxu0 0
          %2200 = vmatprep.subr.bf16.mxu0 0
          %2201 = vmatpush1.bf16.msra.mxu0 0
          %2202 = vmatprep.subr.bf16.mxu0 0
          %2203 = vmatpush1.bf16.msra.mxu0 0
          %2204 = vmatprep.subr.bf16.mxu0 0
          %2205 = vmatpush1.bf16.msra.mxu0 0
          %2206 = vmatprep.mubr.bf16.mxu0 0
          %2207 = vmatmul.mubr.bf16.gmra.mrb[0].mxu0 %v2172
          %v2208 = vpop.f32.mrb[0].mxu0
          %v2209 = vadd.f32 0.0, %v2208
          %v2210 = vpop.f32.mrb[0].mxu0
          %v2211 = vpop.f32.mrb[0].mxu0
          %v2212 = vpop.f32.mrb[0].mxu0
          %2213 = vdwg.mxu0
          %v2214 = vpack.c.bf16 %v2209, %v2209
          %v2215 = vld [vmem:[%s17] sm:$0xf]
          %v2216 = vld [vmem:[%s17 + $0x4] sm:$0xf]
          %v2217 = vld [vmem:[%s17 + $0x8] sm:$0xf]
          %v2218 = vld [vmem:[%s17 + $0xc] sm:$0xf]
          %v2219 = vld [vmem:[%s18] sm:$0x1]
          %v2221 = vlaneseq
          %v2222 = vshrl.u32 %v2221, 7
          %v2223 = vsub.s32 0, %v2222
          %v2224 = vrot.slane %v2219, %v2223
          %v2230 = vunpack.c.l.b16 %v2215
          %v2231 = vunpack.c.l.b16 %v2216
          %v2232 = vunpack.c.l.b16 %v2217
          %v2233 = vunpack.c.l.b16 %v2218
          %v2234 = vpack.c.b16 %v2231, %v2230
          %v2235 = vpack.c.b16 %v2233, %v2232
          %v2239 = vsel %vm842, %v2214, 0
          %2241 = vmatprep.subr.bf16.mxu0 0
          %2242 = vmatpush1.bf16.msra.mxu0 %v2234
          %2243 = vmatprep.subr.bf16.mxu0 0
          %2244 = vmatpush1.bf16.msra.mxu0 %v2235
          %2245 = vmatprep.subr.bf16.mxu0 0
          %2246 = vmatpush1.bf16.msra.mxu0 0
          %2247 = vmatprep.subr.bf16.mxu0 0
          %2248 = vmatpush1.bf16.msra.mxu0 0
          %2249 = vmatprep.subr.bf16.mxu0 0
          %2250 = vmatpush1.bf16.msra.mxu0 0
          %2251 = vmatprep.subr.bf16.mxu0 0
          %2252 = vmatpush1.bf16.msra.mxu0 0
          %2253 = vmatprep.subr.bf16.mxu0 0
          %2254 = vmatpush1.bf16.msra.mxu0 0
          %2255 = vmatprep.subr.bf16.mxu0 0
          %2256 = vmatpush1.bf16.msra.mxu0 0
          %2257 = vmatprep.subr.bf16.mxu0 0
          %2258 = vmatpush1.bf16.msra.mxu0 0
          %2259 = vmatprep.subr.bf16.mxu0 0
          %2260 = vmatpush1.bf16.msra.mxu0 0
          %2261 = vmatprep.subr.bf16.mxu0 0
          %2262 = vmatpush1.bf16.msra.mxu0 0
          %2263 = vmatprep.subr.bf16.mxu0 0
          %2264 = vmatpush1.bf16.msra.mxu0 0
          %2265 = vmatprep.subr.bf16.mxu0 0
          %2266 = vmatpush1.bf16.msra.mxu0 0
          %2267 = vmatprep.subr.bf16.mxu0 0
          %2268 = vmatpush1.bf16.msra.mxu0 0
          %2269 = vmatprep.subr.bf16.mxu0 0
          %2270 = vmatpush1.bf16.msra.mxu0 0
          %2271 = vmatprep.subr.bf16.mxu0 0
          %2272 = vmatpush1.bf16.msra.mxu0 0
          %2273 = vmatprep.mubr.bf16.mxu0 0
          %2274 = vmatmul.mubr.bf16.gmra.mrb[0].mxu0 %v2239
          %v2275 = vpop.f32.mrb[0].mxu0
          %v2276 = vadd.f32 %v2224, %v2275
          %v2277 = vpop.f32.mrb[0].mxu0
          %v2278 = vpop.f32.mrb[0].mxu0
          %v2279 = vpop.f32.mrb[0].mxu0
          %2280 = vdwg.mxu0
          %vm2281 = vcmask 123904
          %2282 = vst.msk [vmem:[#allocation3] sm:$0x3] %vm2281, %v2276
        $region104: #{basic_bert_unit_forward.1} parent=95 // pred_fallthru
          _
        // Predicated region
        $region105: #{basic_bert_unit_forward.1} parent=95 // pred_check
          %p2283 = pneg %p503
        $region106: #{basic_bert_unit_forward.1} parent=95 // pred_check_branch
          %2285 = sbr.rel (%p2283) target = $region108
        $region107: #{basic_bert_unit_forward.1} parent=95 // pred_region
          %s2287 = ssub.s32 32, 32
          %2288 = vsyncadd [#allocation4], %s2287
          %s2290 = sshll.u32 [#allocation3], 4
          %s2291 = int_to_ptr.vmem [resolvable:$true] %s2290
          %2293 = dma.vmem_to_hbm [thread:$0]  %s2291, 32, %s19, [#allocation4]
        $region108: #{basic_bert_unit_forward.1} parent=95 // pred_fallthru
          _
        // Predicated region
        $region109: #{basic_bert_unit_forward.1} parent=95 // pred_check
          %p2294 = pneg %p503
        $region110: #{basic_bert_unit_forward.1} parent=95 // pred_check_branch
          %2296 = sbr.rel (%p2294) target = $region112
        $region111: #{basic_bert_unit_forward.1} parent=95 // pred_region
          %2297 = dma.done [#allocation4], 32
        $region112: #{basic_bert_unit_forward.1} parent=95 // pred_fallthru
          _
      $region96: #{basic_bert_unit_forward.1} parent=5 // pred_fallthru
        _
      %p2298 = scmp.le.s32.totalorder 2, %s26
      // Predicated region
      $region113: #{basic_bert_unit_forward.1} parent=5 // pred_check
        %p2299 = pneg %p2298
      $region114: #{basic_bert_unit_forward.1} parent=5 // pred_check_branch
        %2301 = sbr.rel (%p2299) target = $region116
      $region115: #{basic_bert_unit_forward.1} parent=5 // pred_region
        %s2302 = ssub.s32 %s26, 2
      $region116: #{basic_bert_unit_forward.1} parent=5 // pred_fallthru
        _
    $region6: #{basic_bert_unit_forward.1} parent=1 // loop_footer
      %s30 = sadd.s32 1, %s26
    $region7: #{basic_bert_unit_forward.1} parent=1 // loop_footer_branch
      %25 = sbr.rel target = $region3
    $region8: #{basic_bert_unit_forward.1} parent=1 // loop_exit
      _
    %2303 = vsyncpa [#allocation4], 1
    %s2304 = scalar_lea.sflag [#allocation4], 1
    %2305 = vsyncpa %s2304, 1

</llo_original>
